<compile_context>
chip_gen: v7x
topology: tpu7x:2x2x1
jax: 0.10.0
libtpu: 0.0.40
codegen_flags: <defaults>
</compile_context>

<pallas_src>
import functools

import numpy as np
import jax
import jax.numpy as jnp
from jax import lax
from jax.experimental import pallas as pl
from jax.experimental.pallas import tpu as pltpu

NEG_SLOPE = 0.2
BN_EPS = 1e-5

# Fixed conv hyper-parameters of the module (l = 3 configuration).
KH0 = KW0 = 4   # layer-0 kernel
KH1 = KW1 = 8   # layer-1 kernel
STRIDE = 2
PAD = 1


def _leaky(v):
    return jnp.where(v >= 0, v, NEG_SLOPE * v)


# -----------------------------------------------------------------------------
# Single fused kernel.
#   x_ref     : (B*OH0, KH0*Wp*nc)   conv0 row-slabs, [odd-row block | even-row
#                                    block], b-major inside each block
#   w0r_ref   : (KH0*Wp*nc, OW0*ndf) conv0 width-Toeplitz (real weights only)
#   w1r_ref   : (KH1, OW0*ndf, OW1*c1) conv1 per-kernel-row width-Toeplitz
#   wfc_ref   : (OH1*OW1*c1, 2*nz)   fc21|fc22 fused, rows in (h, w, c) order
#   small_ref : (1, 2*c1 + 2*nz)     [gamma | beta | b21 | b22]
#   o_ref     : (B, 2*nz)
# -----------------------------------------------------------------------------
def _encoder_kernel(x_ref, w0r_ref, w1r_ref, wfc_ref, small_ref, o_ref, *,
                    B, oh0, ow0, ndf, oh1, ow1, c1, nz):
    f32 = jnp.float32
    row_w = ow0 * ndf          # conv0 output-row width, (w0, co) layout
    ne = oh0 // 2              # conv0 output rows per (batch, parity)
    half = B * ne

    # ---- layer 0: Conv2d(nc, ndf, 4, 2, 1) as ONE matmul (M = B*OH0) + Leaky.
    y0 = jnp.dot(x_ref[...], w0r_ref[...], preferred_element_type=f32)
    y0 = _leaky(y0)                                      # (B*oh0, row_w)

    w1r = w1r_ref[...]                                   # (KH1, row_w, ow1*c1)
    small = small_ref[...]
    gamma = small[:, 0:c1]
    beta = small[:, c1:2 * c1]
    bfc = small[:, 2 * c1:2 * c1 + 2 * nz]

    # ---- layer 1: Conv2d(ndf, c1, 8, 2, 1), decomposed over the 8 kernel
    # rows.  Padded input rows hp = 2*oh + ki share ki's parity, so each term
    # is a contiguous (oh1, row_w) slab of the per-parity padded buffers.
    zrow = jnp.zeros((1, row_w), f32)
    y1s = []
    for b in range(B):
        ye = y0[b * ne:(b + 1) * ne, :]                  # odd h0 -> even hp
        yo = y0[half + b * ne: half + (b + 1) * ne, :]   # even h0 -> odd hp
        pe = jnp.concatenate([zrow, ye], axis=0)         # hp = 0,2,...,oh0
        po = jnp.concatenate([yo, zrow], axis=0)         # hp = 1,3,...,oh0+1
        acc = jnp.zeros((oh1, ow1 * c1), f32)
        for ki in range(KH1):
            src = pe if ki % 2 == 0 else po
            slab = src[ki // 2: ki // 2 + oh1, :]        # (oh1, row_w)
            acc = acc + jnp.dot(slab, w1r[ki], preferred_element_type=f32)
        y1s.append(acc)                                  # (oh1, ow1*c1)

    # ---- BatchNorm2d, training-mode batch statistics (biased variance).
    # Columns are channel-fastest (channel = lane % c1): fold with lane
    # slices, broadcast back with lane concat -- no one-hot operands.
    def fold(v):               # (1, ow1*c1) -> (1, c1)
        out = v[:, 0:c1]
        for g in range(1, ow1):
            out = out + v[:, g * c1:(g + 1) * c1]
        return out

    def bcast(v):              # (1, c1) -> (1, ow1*c1)
        return jnp.concatenate([v] * ow1, axis=1)

    count = float(B * oh1 * ow1)
    s_l = jnp.sum(y1s[0], axis=0, keepdims=True)
    for b in range(1, B):
        s_l = s_l + jnp.sum(y1s[b], axis=0, keepdims=True)
    mean_b = bcast(fold(s_l) / count)
    ds = [y1 - mean_b for y1 in y1s]
    q_l = jnp.sum(ds[0] * ds[0], axis=0, keepdims=True)
    for b in range(1, B):
        q_l = q_l + jnp.sum(ds[b] * ds[b], axis=0, keepdims=True)
    var_c = fold(q_l) / count
    scale_b = bcast(gamma * lax.rsqrt(var_c + BN_EPS))
    beta_b = bcast(beta)

    # ---- LeakyReLU + fc21|fc22 fused into one lane-dense (B,128)@(128,16).
    feats = []
    for b in range(B):
        y1n = _leaky(ds[b] * scale_b + beta_b)           # (oh1, ow1*c1)
        flat = jnp.concatenate([y1n[r:r + 1, :] for r in range(oh1)], axis=1)
        feats.append(flat)                               # (1, oh1*ow1*c1)
    feats = jnp.concatenate(feats, axis=0)               # (B, oh1*ow1*c1)
    out = jnp.dot(feats, wfc_ref[...], preferred_element_type=f32) + bfc
    o_ref[...] = out.astype(o_ref.dtype)


# -----------------------------------------------------------------------------
# Weight-only preprocessing.  Host-side numpy, run ONCE (not on the traced
# forward path).
# -----------------------------------------------------------------------------
def prepare_params(params, H, W):
    w0 = np.asarray(params["w0"], np.float32)    # (ndf, nc, 4, 4)
    w1 = np.asarray(params["w1"], np.float32)    # (c1, ndf, 8, 8)
    ndf, nc = w0.shape[0], w0.shape[1]
    c1 = w1.shape[0]
    OH0 = (H + 2 * PAD - KH0) // STRIDE + 1
    OW0 = (W + 2 * PAD - KW0) // STRIDE + 1
    OH1 = (OH0 + 2 * PAD - KH1) // STRIDE + 1
    OW1 = (OW0 + 2 * PAD - KW1) // STRIDE + 1
    Wp = W + 2 * PAD

    # conv0 width-Toeplitz: rows (ki, wp, ci), cols (w0, co).
    w0r = np.zeros((KH0 * Wp * nc, OW0 * ndf), np.float32)
    for ki in range(KH0):
        for wo in range(OW0):
            for kj in range(KW0):
                wp = STRIDE * wo + kj
                r0 = ki * (Wp * nc) + wp * nc
                w0r[r0:r0 + nc, wo * ndf:(wo + 1) * ndf] = w0[:, :, ki, kj].T

    # conv1 per-kernel-row width-Toeplitz: (ki, (wi, ci), (ow, co)).
    w1r = np.zeros((KH1, OW0 * ndf, OW1 * c1), np.float32)
    for ki in range(KH1):
        for ow in range(OW1):
            for kj in range(KW1):
                wi = STRIDE * ow + kj - PAD
                if 0 <= wi < OW0:
                    w1r[ki, wi * ndf:(wi + 1) * ndf, ow * c1:(ow + 1) * c1] = \
                        w1[:, :, ki, kj].T

    # fc21|fc22 fused; rows re-ordered from PyTorch NCHW flatten (c, h, w)
    # to the kernel's (h, w, c) feature order.
    w21 = np.asarray(params["w21"], np.float32)
    w22 = np.asarray(params["w22"], np.float32)
    nz = w21.shape[0]
    wall = np.concatenate([w21, w22], axis=0)             # (2*nz, c1*OH1*OW1)
    wfc = np.zeros((OH1 * OW1 * c1, 2 * nz), np.float32)
    for oh in range(OH1):
        for ow in range(OW1):
            for co in range(c1):
                wfc[oh * (OW1 * c1) + ow * c1 + co, :] = \
                    wall[:, co * (OH1 * OW1) + oh * OW1 + ow]

    small = np.concatenate([
        np.asarray(params["bn_gamma"], np.float32),
        np.asarray(params["bn_beta"], np.float32),
        np.asarray(params["b21"], np.float32),
        np.asarray(params["b22"], np.float32)]).reshape(1, -1)

    return {"w0r": jnp.asarray(w0r), "w1r": jnp.asarray(w1r),
            "wfc": jnp.asarray(wfc), "small": jnp.asarray(small)}


# -----------------------------------------------------------------------------
# Forward wrapper: only activation-path prep is a ~30 KB row-slab gather of
# the (padded) input; everything else happens inside one pallas_call.
# -----------------------------------------------------------------------------
def encoder_forward(x_nchw, prep, nz):
    B, nc, H, W = x_nchw.shape
    OH0 = (H + 2 * PAD - KH0) // STRIDE + 1
    OW0 = (W + 2 * PAD - KW0) // STRIDE + 1
    OH1 = (OH0 + 2 * PAD - KH1) // STRIDE + 1
    OW1 = (OW0 + 2 * PAD - KW1) // STRIDE + 1
    Wp = W + 2 * PAD
    ndf = prep["w0r"].shape[1] // OW0
    c1 = prep["w1r"].shape[2] // OW1
    assert OH0 % 2 == 0, "row-parity split assumes an even conv0 output height"

    xpad = jnp.pad(x_nchw.astype(jnp.float32),
                   ((0, 0), (0, 0), (PAD, PAD), (PAD, PAD)))

    def row_slabs(h0s):
        idx = STRIDE * h0s[:, None] + np.arange(KH0)[None, :]    # (len, KH0)
        g = xpad[:, :, idx, :]                                    # (B,nc,len,KH0,Wp)
        g = jnp.transpose(g, (0, 2, 3, 4, 1))                     # (B,len,KH0,Wp,nc)
        return g.reshape(B * h0s.shape[0], KH0 * Wp * nc)

    # [odd conv0 output rows | even conv0 output rows], b-major inside each.
    xrows = jnp.concatenate(
        [row_slabs(np.arange(1, OH0, 2)), row_slabs(np.arange(0, OH0, 2))],
        axis=0)

    kernel = functools.partial(_encoder_kernel, B=B, oh0=OH0, ow0=OW0, ndf=ndf,
                               oh1=OH1, ow1=OW1, c1=c1, nz=nz)

    def full(shp):
        return pl.BlockSpec(shp, lambda i, _s=shp: (0,) * len(_s))

    out = pl.pallas_call(
        kernel,
        out_shape=jax.ShapeDtypeStruct((B, 2 * nz), jnp.float32),
        grid=(1,),
        in_specs=[full(xrows.shape), full(prep["w0r"].shape),
                  full(prep["w1r"].shape), full(prep["wfc"].shape),
                  full(prep["small"].shape)],
        out_specs=full((B, 2 * nz)),
        compiler_params=pltpu.CompilerParams(
            dimension_semantics=("arbitrary",)),
    )(xrows, prep["w0r"], prep["w1r"], prep["wfc"], prep["small"])
    return out[:, :nz], out[:, nz:]


# -----------------------------------------------------------------------------
# Pure-JAX reference (NCHW, lax.conv) to validate the kernel path.
# -----------------------------------------------------------------------------
def encoder_reference(x, params):
    y = lax.conv_general_dilated(x, params["w0"], (2, 2), [(1, 1), (1, 1)],
                                 dimension_numbers=("NCHW", "OIHW", "NCHW"))
    y = _leaky(y)
    y = lax.conv_general_dilated(y, params["w1"], (2, 2), [(1, 1), (1, 1)],
                                 dimension_numbers=("NCHW", "OIHW", "NCHW"))
    mean = jnp.mean(y, axis=(0, 2, 3), keepdims=True)
    var = jnp.mean((y - mean) ** 2, axis=(0, 2, 3), keepdims=True)
    y = (y - mean) * lax.rsqrt(var + BN_EPS)
    y = y * params["bn_gamma"].reshape(1, -1, 1, 1) + \
        params["bn_beta"].reshape(1, -1, 1, 1)
    y = _leaky(y)
    flat = y.reshape(y.shape[0], -1)
    mu = flat @ params["w21"].T + params["b21"]
    lv = flat @ params["w22"].T + params["b22"]
    return mu, lv


if __name__ == "__main__":
    # Module hyperparameters (small): l=3, nc=3, ndf=4, nz=8.
    # fc input = 16*ndf*2**(l-2) = 128 -> final map is (2*ndf) x 4 x 4, which
    # requires a 24x24 spatial input through the two strided convolutions.
    nc, ndf, nz, l = 3, 4, 8, 3
    B, H, W = 2, 24, 24
    fc_in = 16 * ndf * 2 ** (l - 2)  # 128

    key = jax.random.PRNGKey(0)
    k = jax.random.split(key, 9)
    params = {
        "w0": 0.1 * jax.random.normal(k[0], (ndf, nc, 4, 4), jnp.float32),
        "w1": 0.05 * jax.random.normal(k[1], (2 * ndf, ndf, 8, 8), jnp.float32),
        "bn_gamma": 1.0 + 0.1 * jax.random.normal(k[2], (2 * ndf,), jnp.float32),
        "bn_beta": 0.1 * jax.random.normal(k[3], (2 * ndf,), jnp.float32),
        "w21": 0.05 * jax.random.normal(k[4], (nz, fc_in), jnp.float32),
        "b21": 0.05 * jax.random.normal(k[5], (nz,), jnp.float32),
        "w22": 0.05 * jax.random.normal(k[6], (nz, fc_in), jnp.float32),
        "b22": 0.05 * jax.random.normal(k[7], (nz,), jnp.float32),
    }
    x = jax.random.normal(k[8], (B, nc, H, W), jnp.float32)

    # Weight preprocessing runs ONCE, off the traced forward path.
    prep = prepare_params(params, H, W)

    fwd = jax.jit(lambda xx, pp: encoder_forward(xx, pp, nz))
    mu, logvar = fwd(x, prep)
    jax.block_until_ready((mu, logvar))

    mu_ref, lv_ref = encoder_reference(x, params)
    assert mu.shape == (B, nz) and logvar.shape == (B, nz)
    assert jnp.allclose(mu, mu_ref, rtol=1e-3, atol=1e-3)
    assert jnp.allclose(logvar, lv_ref, rtol=1e-3, atol=1e-3)

    print("KERNEL_OK")
</pallas_src>

<mosaic_0001>
module attributes {stable_mosaic.version = 11 : i64} {
  func.func @_encoder_kernel(%arg0: i32, %arg1: memref<24x312xf32, #tpu.memory_space<vmem>>, %arg2: memref<312x48xf32, #tpu.memory_space<vmem>>, %arg3: memref<8x48x32xf32, #tpu.memory_space<vmem>>, %arg4: memref<128x16xf32, #tpu.memory_space<vmem>>, %arg5: memref<1x32xf32, #tpu.memory_space<vmem>>, %arg6: memref<2x16xf32, #tpu.memory_space<vmem>>) attributes {dimension_semantics = [#tpu.dimension_semantics<arbitrary>], iteration_bounds = array<i64: 1>, scalar_prefetch = 0 : i64, scratch_operands = 0 : i64, tpu.core_type = #tpu.core_type<tc>, window_params = [{pipeline_mode = #tpu.pipeline_mode<synchronous>, transform_indices = @transform_0, window_bounds = array<i64: 24, 312>}, {pipeline_mode = #tpu.pipeline_mode<synchronous>, transform_indices = @transform_1, window_bounds = array<i64: 312, 48>}, {pipeline_mode = #tpu.pipeline_mode<synchronous>, transform_indices = @transform_2, window_bounds = array<i64: 8, 48, 32>}, {pipeline_mode = #tpu.pipeline_mode<synchronous>, transform_indices = @transform_3, window_bounds = array<i64: 128, 16>}, {pipeline_mode = #tpu.pipeline_mode<synchronous>, transform_indices = @transform_4, window_bounds = array<i64: 1, 32>}, {pipeline_mode = #tpu.pipeline_mode<synchronous>, transform_indices = @transform_5, window_bounds = array<i64: 2, 16>}]} {
    %c0 = arith.constant 0 : index
    %c0_0 = arith.constant 0 : index
    %0 = vector.load %arg1[%c0, %c0_0] : memref<24x312xf32, #tpu.memory_space<vmem>>, vector<24x312xf32>
    %c0_1 = arith.constant 0 : index
    %c0_2 = arith.constant 0 : index
    %1 = vector.load %arg2[%c0_1, %c0_2] : memref<312x48xf32, #tpu.memory_space<vmem>>, vector<312x48xf32>
    %cst = arith.constant dense<0.000000e+00> : vector<24x48xf32>
    %2 = tpu.matmul %0, %1, %cst {dimension_numbers = #tpu.dot_dimension_numbers<[1], [0], [0], [1], [0, 0, 1, 1], [], []>} : vector<24x312xf32>, vector<312x48xf32>, vector<24x48xf32> -> vector<24x48xf32>
    %cst_3 = arith.constant 0.000000e+00 : f32
    %3 = vector.broadcast %cst_3 : f32 to vector<24x48xf32>
    %4 = arith.cmpf oge, %2, %3 : vector<24x48xf32>
    %cst_4 = arith.constant 2.000000e-01 : f32
    %5 = vector.broadcast %cst_4 : f32 to vector<24x48xf32>
    %6 = arith.mulf %5, %2 : vector<24x48xf32>
    %7 = arith.select %4, %2, %6 : vector<24x48xi1>, vector<24x48xf32>
    %c0_5 = arith.constant 0 : index
    %c0_6 = arith.constant 0 : index
    %c0_7 = arith.constant 0 : index
    %8 = vector.load %arg3[%c0_5, %c0_6, %c0_7] : memref<8x48x32xf32, #tpu.memory_space<vmem>>, vector<8x48x32xf32>
    %c0_8 = arith.constant 0 : index
    %c0_9 = arith.constant 0 : index
    %9 = vector.load %arg5[%c0_8, %c0_9] : memref<1x32xf32, #tpu.memory_space<vmem>>, vector<1x32xf32>
    %10 = vector.extract_strided_slice %9 {offsets = [0, 0], sizes = [1, 8], strides = [1, 1]} : vector<1x32xf32> to vector<1x8xf32>
    %11 = vector.extract_strided_slice %9 {offsets = [0, 8], sizes = [1, 8], strides = [1, 1]} : vector<1x32xf32> to vector<1x8xf32>
    %12 = vector.extract_strided_slice %9 {offsets = [0, 16], sizes = [1, 16], strides = [1, 1]} : vector<1x32xf32> to vector<1x16xf32>
    %cst_10 = arith.constant 0.000000e+00 : f32
    %13 = vector.broadcast %cst_10 : f32 to vector<1x48xf32>
    %14 = vector.extract_strided_slice %7 {offsets = [0, 0], sizes = [6, 48], strides = [1, 1]} : vector<24x48xf32> to vector<6x48xf32>
    %15 = vector.extract_strided_slice %7 {offsets = [12, 0], sizes = [6, 48], strides = [1, 1]} : vector<24x48xf32> to vector<6x48xf32>
    %16 = tpu.concatenate %13, %14 in 0 : vector<1x48xf32>, vector<6x48xf32> -> vector<7x48xf32>
    %17 = tpu.concatenate %15, %13 in 0 : vector<6x48xf32>, vector<1x48xf32> -> vector<7x48xf32>
    %cst_11 = arith.constant 0.000000e+00 : f32
    %18 = vector.broadcast %cst_11 : f32 to vector<4x32xf32>
    %19 = vector.extract_strided_slice %16 {offsets = [0, 0], sizes = [4, 48], strides = [1, 1]} : vector<7x48xf32> to vector<4x48xf32>
    %20 = vector.extract_strided_slice %8 {offsets = [0, 0, 0], sizes = [1, 48, 32], strides = [1, 1, 1]} : vector<8x48x32xf32> to vector<1x48x32xf32>
    %21 = vector.shape_cast %20 : vector<1x48x32xf32> to vector<48x32xf32>
    %cst_12 = arith.constant dense<0.000000e+00> : vector<4x32xf32>
    %22 = tpu.matmul %19, %21, %cst_12 {dimension_numbers = #tpu.dot_dimension_numbers<[1], [0], [0], [1], [0, 0, 1, 1], [], []>} : vector<4x48xf32>, vector<48x32xf32>, vector<4x32xf32> -> vector<4x32xf32>
    %23 = arith.addf %18, %22 : vector<4x32xf32>
    %24 = vector.extract_strided_slice %17 {offsets = [0, 0], sizes = [4, 48], strides = [1, 1]} : vector<7x48xf32> to vector<4x48xf32>
    %25 = vector.extract_strided_slice %8 {offsets = [1, 0, 0], sizes = [1, 48, 32], strides = [1, 1, 1]} : vector<8x48x32xf32> to vector<1x48x32xf32>
    %26 = vector.shape_cast %25 : vector<1x48x32xf32> to vector<48x32xf32>
    %cst_13 = arith.constant dense<0.000000e+00> : vector<4x32xf32>
    %27 = tpu.matmul %24, %26, %cst_13 {dimension_numbers = #tpu.dot_dimension_numbers<[1], [0], [0], [1], [0, 0, 1, 1], [], []>} : vector<4x48xf32>, vector<48x32xf32>, vector<4x32xf32> -> vector<4x32xf32>
    %28 = arith.addf %23, %27 : vector<4x32xf32>
    %29 = vector.extract_strided_slice %16 {offsets = [1, 0], sizes = [4, 48], strides = [1, 1]} : vector<7x48xf32> to vector<4x48xf32>
    %30 = vector.extract_strided_slice %8 {offsets = [2, 0, 0], sizes = [1, 48, 32], strides = [1, 1, 1]} : vector<8x48x32xf32> to vector<1x48x32xf32>
    %31 = vector.shape_cast %30 : vector<1x48x32xf32> to vector<48x32xf32>
    %cst_14 = arith.constant dense<0.000000e+00> : vector<4x32xf32>
    %32 = tpu.matmul %29, %31, %cst_14 {dimension_numbers = #tpu.dot_dimension_numbers<[1], [0], [0], [1], [0, 0, 1, 1], [], []>} : vector<4x48xf32>, vector<48x32xf32>, vector<4x32xf32> -> vector<4x32xf32>
    %33 = arith.addf %28, %32 : vector<4x32xf32>
    %34 = vector.extract_strided_slice %17 {offsets = [1, 0], sizes = [4, 48], strides = [1, 1]} : vector<7x48xf32> to vector<4x48xf32>
    %35 = vector.extract_strided_slice %8 {offsets = [3, 0, 0], sizes = [1, 48, 32], strides = [1, 1, 1]} : vector<8x48x32xf32> to vector<1x48x32xf32>
    %36 = vector.shape_cast %35 : vector<1x48x32xf32> to vector<48x32xf32>
    %cst_15 = arith.constant dense<0.000000e+00> : vector<4x32xf32>
    %37 = tpu.matmul %34, %36, %cst_15 {dimension_numbers = #tpu.dot_dimension_numbers<[1], [0], [0], [1], [0, 0, 1, 1], [], []>} : vector<4x48xf32>, vector<48x32xf32>, vector<4x32xf32> -> vector<4x32xf32>
    %38 = arith.addf %33, %37 : vector<4x32xf32>
    %39 = vector.extract_strided_slice %16 {offsets = [2, 0], sizes = [4, 48], strides = [1, 1]} : vector<7x48xf32> to vector<4x48xf32>
    %40 = vector.extract_strided_slice %8 {offsets = [4, 0, 0], sizes = [1, 48, 32], strides = [1, 1, 1]} : vector<8x48x32xf32> to vector<1x48x32xf32>
    %41 = vector.shape_cast %40 : vector<1x48x32xf32> to vector<48x32xf32>
    %cst_16 = arith.constant dense<0.000000e+00> : vector<4x32xf32>
    %42 = tpu.matmul %39, %41, %cst_16 {dimension_numbers = #tpu.dot_dimension_numbers<[1], [0], [0], [1], [0, 0, 1, 1], [], []>} : vector<4x48xf32>, vector<48x32xf32>, vector<4x32xf32> -> vector<4x32xf32>
    %43 = arith.addf %38, %42 : vector<4x32xf32>
    %44 = vector.extract_strided_slice %17 {offsets = [2, 0], sizes = [4, 48], strides = [1, 1]} : vector<7x48xf32> to vector<4x48xf32>
    %45 = vector.extract_strided_slice %8 {offsets = [5, 0, 0], sizes = [1, 48, 32], strides = [1, 1, 1]} : vector<8x48x32xf32> to vector<1x48x32xf32>
    %46 = vector.shape_cast %45 : vector<1x48x32xf32> to vector<48x32xf32>
    %cst_17 = arith.constant dense<0.000000e+00> : vector<4x32xf32>
    %47 = tpu.matmul %44, %46, %cst_17 {dimension_numbers = #tpu.dot_dimension_numbers<[1], [0], [0], [1], [0, 0, 1, 1], [], []>} : vector<4x48xf32>, vector<48x32xf32>, vector<4x32xf32> -> vector<4x32xf32>
    %48 = arith.addf %43, %47 : vector<4x32xf32>
    %49 = vector.extract_strided_slice %16 {offsets = [3, 0], sizes = [4, 48], strides = [1, 1]} : vector<7x48xf32> to vector<4x48xf32>
    %50 = vector.extract_strided_slice %8 {offsets = [6, 0, 0], sizes = [1, 48, 32], strides = [1, 1, 1]} : vector<8x48x32xf32> to vector<1x48x32xf32>
    %51 = vector.shape_cast %50 : vector<1x48x32xf32> to vector<48x32xf32>
    %cst_18 = arith.constant dense<0.000000e+00> : vector<4x32xf32>
    %52 = tpu.matmul %49, %51, %cst_18 {dimension_numbers = #tpu.dot_dimension_numbers<[1], [0], [0], [1], [0, 0, 1, 1], [], []>} : vector<4x48xf32>, vector<48x32xf32>, vector<4x32xf32> -> vector<4x32xf32>
    %53 = arith.addf %48, %52 : vector<4x32xf32>
    %54 = vector.extract_strided_slice %17 {offsets = [3, 0], sizes = [4, 48], strides = [1, 1]} : vector<7x48xf32> to vector<4x48xf32>
    %55 = vector.extract_strided_slice %8 {offsets = [7, 0, 0], sizes = [1, 48, 32], strides = [1, 1, 1]} : vector<8x48x32xf32> to vector<1x48x32xf32>
    %56 = vector.shape_cast %55 : vector<1x48x32xf32> to vector<48x32xf32>
    %cst_19 = arith.constant dense<0.000000e+00> : vector<4x32xf32>
    %57 = tpu.matmul %54, %56, %cst_19 {dimension_numbers = #tpu.dot_dimension_numbers<[1], [0], [0], [1], [0, 0, 1, 1], [], []>} : vector<4x48xf32>, vector<48x32xf32>, vector<4x32xf32> -> vector<4x32xf32>
    %58 = arith.addf %53, %57 : vector<4x32xf32>
    %59 = vector.extract_strided_slice %7 {offsets = [6, 0], sizes = [6, 48], strides = [1, 1]} : vector<24x48xf32> to vector<6x48xf32>
    %60 = vector.extract_strided_slice %7 {offsets = [18, 0], sizes = [6, 48], strides = [1, 1]} : vector<24x48xf32> to vector<6x48xf32>
    %61 = tpu.concatenate %13, %59 in 0 : vector<1x48xf32>, vector<6x48xf32> -> vector<7x48xf32>
    %62 = tpu.concatenate %60, %13 in 0 : vector<6x48xf32>, vector<1x48xf32> -> vector<7x48xf32>
    %cst_20 = arith.constant 0.000000e+00 : f32
    %63 = vector.broadcast %cst_20 : f32 to vector<4x32xf32>
    %64 = vector.extract_strided_slice %61 {offsets = [0, 0], sizes = [4, 48], strides = [1, 1]} : vector<7x48xf32> to vector<4x48xf32>
    %65 = vector.extract_strided_slice %8 {offsets = [0, 0, 0], sizes = [1, 48, 32], strides = [1, 1, 1]} : vector<8x48x32xf32> to vector<1x48x32xf32>
    %66 = vector.shape_cast %65 : vector<1x48x32xf32> to vector<48x32xf32>
    %cst_21 = arith.constant dense<0.000000e+00> : vector<4x32xf32>
    %67 = tpu.matmul %64, %66, %cst_21 {dimension_numbers = #tpu.dot_dimension_numbers<[1], [0], [0], [1], [0, 0, 1, 1], [], []>} : vector<4x48xf32>, vector<48x32xf32>, vector<4x32xf32> -> vector<4x32xf32>
    %68 = arith.addf %63, %67 : vector<4x32xf32>
    %69 = vector.extract_strided_slice %62 {offsets = [0, 0], sizes = [4, 48], strides = [1, 1]} : vector<7x48xf32> to vector<4x48xf32>
    %70 = vector.extract_strided_slice %8 {offsets = [1, 0, 0], sizes = [1, 48, 32], strides = [1, 1, 1]} : vector<8x48x32xf32> to vector<1x48x32xf32>
    %71 = vector.shape_cast %70 : vector<1x48x32xf32> to vector<48x32xf32>
    %cst_22 = arith.constant dense<0.000000e+00> : vector<4x32xf32>
    %72 = tpu.matmul %69, %71, %cst_22 {dimension_numbers = #tpu.dot_dimension_numbers<[1], [0], [0], [1], [0, 0, 1, 1], [], []>} : vector<4x48xf32>, vector<48x32xf32>, vector<4x32xf32> -> vector<4x32xf32>
    %73 = arith.addf %68, %72 : vector<4x32xf32>
    %74 = vector.extract_strided_slice %61 {offsets = [1, 0], sizes = [4, 48], strides = [1, 1]} : vector<7x48xf32> to vector<4x48xf32>
    %75 = vector.extract_strided_slice %8 {offsets = [2, 0, 0], sizes = [1, 48, 32], strides = [1, 1, 1]} : vector<8x48x32xf32> to vector<1x48x32xf32>
    %76 = vector.shape_cast %75 : vector<1x48x32xf32> to vector<48x32xf32>
    %cst_23 = arith.constant dense<0.000000e+00> : vector<4x32xf32>
    %77 = tpu.matmul %74, %76, %cst_23 {dimension_numbers = #tpu.dot_dimension_numbers<[1], [0], [0], [1], [0, 0, 1, 1], [], []>} : vector<4x48xf32>, vector<48x32xf32>, vector<4x32xf32> -> vector<4x32xf32>
    %78 = arith.addf %73, %77 : vector<4x32xf32>
    %79 = vector.extract_strided_slice %62 {offsets = [1, 0], sizes = [4, 48], strides = [1, 1]} : vector<7x48xf32> to vector<4x48xf32>
    %80 = vector.extract_strided_slice %8 {offsets = [3, 0, 0], sizes = [1, 48, 32], strides = [1, 1, 1]} : vector<8x48x32xf32> to vector<1x48x32xf32>
    %81 = vector.shape_cast %80 : vector<1x48x32xf32> to vector<48x32xf32>
    %cst_24 = arith.constant dense<0.000000e+00> : vector<4x32xf32>
    %82 = tpu.matmul %79, %81, %cst_24 {dimension_numbers = #tpu.dot_dimension_numbers<[1], [0], [0], [1], [0, 0, 1, 1], [], []>} : vector<4x48xf32>, vector<48x32xf32>, vector<4x32xf32> -> vector<4x32xf32>
    %83 = arith.addf %78, %82 : vector<4x32xf32>
    %84 = vector.extract_strided_slice %61 {offsets = [2, 0], sizes = [4, 48], strides = [1, 1]} : vector<7x48xf32> to vector<4x48xf32>
    %85 = vector.extract_strided_slice %8 {offsets = [4, 0, 0], sizes = [1, 48, 32], strides = [1, 1, 1]} : vector<8x48x32xf32> to vector<1x48x32xf32>
    %86 = vector.shape_cast %85 : vector<1x48x32xf32> to vector<48x32xf32>
    %cst_25 = arith.constant dense<0.000000e+00> : vector<4x32xf32>
    %87 = tpu.matmul %84, %86, %cst_25 {dimension_numbers = #tpu.dot_dimension_numbers<[1], [0], [0], [1], [0, 0, 1, 1], [], []>} : vector<4x48xf32>, vector<48x32xf32>, vector<4x32xf32> -> vector<4x32xf32>
    %88 = arith.addf %83, %87 : vector<4x32xf32>
    %89 = vector.extract_strided_slice %62 {offsets = [2, 0], sizes = [4, 48], strides = [1, 1]} : vector<7x48xf32> to vector<4x48xf32>
    %90 = vector.extract_strided_slice %8 {offsets = [5, 0, 0], sizes = [1, 48, 32], strides = [1, 1, 1]} : vector<8x48x32xf32> to vector<1x48x32xf32>
    %91 = vector.shape_cast %90 : vector<1x48x32xf32> to vector<48x32xf32>
    %cst_26 = arith.constant dense<0.000000e+00> : vector<4x32xf32>
    %92 = tpu.matmul %89, %91, %cst_26 {dimension_numbers = #tpu.dot_dimension_numbers<[1], [0], [0], [1], [0, 0, 1, 1], [], []>} : vector<4x48xf32>, vector<48x32xf32>, vector<4x32xf32> -> vector<4x32xf32>
    %93 = arith.addf %88, %92 : vector<4x32xf32>
    %94 = vector.extract_strided_slice %61 {offsets = [3, 0], sizes = [4, 48], strides = [1, 1]} : vector<7x48xf32> to vector<4x48xf32>
    %95 = vector.extract_strided_slice %8 {offsets = [6, 0, 0], sizes = [1, 48, 32], strides = [1, 1, 1]} : vector<8x48x32xf32> to vector<1x48x32xf32>
    %96 = vector.shape_cast %95 : vector<1x48x32xf32> to vector<48x32xf32>
    %cst_27 = arith.constant dense<0.000000e+00> : vector<4x32xf32>
    %97 = tpu.matmul %94, %96, %cst_27 {dimension_numbers = #tpu.dot_dimension_numbers<[1], [0], [0], [1], [0, 0, 1, 1], [], []>} : vector<4x48xf32>, vector<48x32xf32>, vector<4x32xf32> -> vector<4x32xf32>
    %98 = arith.addf %93, %97 : vector<4x32xf32>
    %99 = vector.extract_strided_slice %62 {offsets = [3, 0], sizes = [4, 48], strides = [1, 1]} : vector<7x48xf32> to vector<4x48xf32>
    %100 = vector.extract_strided_slice %8 {offsets = [7, 0, 0], sizes = [1, 48, 32], strides = [1, 1, 1]} : vector<8x48x32xf32> to vector<1x48x32xf32>
    %101 = vector.shape_cast %100 : vector<1x48x32xf32> to vector<48x32xf32>
    %cst_28 = arith.constant dense<0.000000e+00> : vector<4x32xf32>
    %102 = tpu.matmul %99, %101, %cst_28 {dimension_numbers = #tpu.dot_dimension_numbers<[1], [0], [0], [1], [0, 0, 1, 1], [], []>} : vector<4x48xf32>, vector<48x32xf32>, vector<4x32xf32> -> vector<4x32xf32>
    %103 = arith.addf %98, %102 : vector<4x32xf32>
    %cst_29 = arith.constant dense<0.000000e+00> : vector<32xf32>
    %104 = vector.multi_reduction <add>, %58, %cst_29 [0] : vector<4x32xf32> to vector<32xf32>
    %105 = vector.shape_cast %104 : vector<32xf32> to vector<1x32xf32>
    %cst_30 = arith.constant dense<0.000000e+00> : vector<32xf32>
    %106 = vector.multi_reduction <add>, %103, %cst_30 [0] : vector<4x32xf32> to vector<32xf32>
    %107 = vector.shape_cast %106 : vector<32xf32> to vector<1x32xf32>
    %108 = arith.addf %105, %107 : vector<1x32xf32>
    %109 = vector.extract_strided_slice %108 {offsets = [0, 0], sizes = [1, 8], strides = [1, 1]} : vector<1x32xf32> to vector<1x8xf32>
    %110 = vector.extract_strided_slice %108 {offsets = [0, 8], sizes = [1, 8], strides = [1, 1]} : vector<1x32xf32> to vector<1x8xf32>
    %111 = arith.addf %109, %110 : vector<1x8xf32>
    %112 = vector.extract_strided_slice %108 {offsets = [0, 16], sizes = [1, 8], strides = [1, 1]} : vector<1x32xf32> to vector<1x8xf32>
    %113 = arith.addf %111, %112 : vector<1x8xf32>
    %114 = vector.extract_strided_slice %108 {offsets = [0, 24], sizes = [1, 8], strides = [1, 1]} : vector<1x32xf32> to vector<1x8xf32>
    %115 = arith.addf %113, %114 : vector<1x8xf32>
    %cst_31 = arith.constant 3.200000e+01 : f32
    %116 = vector.broadcast %cst_31 : f32 to vector<1x8xf32>
    %117 = arith.divf %115, %116 : vector<1x8xf32>
    %118 = tpu.concatenate %117, %117, %117, %117 in 1 : vector<1x8xf32>, vector<1x8xf32>, vector<1x8xf32>, vector<1x8xf32> -> vector<1x32xf32>
    %119 = vector.broadcast %118 : vector<1x32xf32> to vector<4x32xf32>
    %120 = arith.subf %58, %119 : vector<4x32xf32>
    %121 = vector.broadcast %118 : vector<1x32xf32> to vector<4x32xf32>
    %122 = arith.subf %103, %121 : vector<4x32xf32>
    %123 = arith.mulf %120, %120 : vector<4x32xf32>
    %cst_32 = arith.constant dense<0.000000e+00> : vector<32xf32>
    %124 = vector.multi_reduction <add>, %123, %cst_32 [0] : vector<4x32xf32> to vector<32xf32>
    %125 = vector.shape_cast %124 : vector<32xf32> to vector<1x32xf32>
    %126 = arith.mulf %122, %122 : vector<4x32xf32>
    %cst_33 = arith.constant dense<0.000000e+00> : vector<32xf32>
    %127 = vector.multi_reduction <add>, %126, %cst_33 [0] : vector<4x32xf32> to vector<32xf32>
    %128 = vector.shape_cast %127 : vector<32xf32> to vector<1x32xf32>
    %129 = arith.addf %125, %128 : vector<1x32xf32>
    %130 = vector.extract_strided_slice %129 {offsets = [0, 0], sizes = [1, 8], strides = [1, 1]} : vector<1x32xf32> to vector<1x8xf32>
    %131 = vector.extract_strided_slice %129 {offsets = [0, 8], sizes = [1, 8], strides = [1, 1]} : vector<1x32xf32> to vector<1x8xf32>
    %132 = arith.addf %130, %131 : vector<1x8xf32>
    %133 = vector.extract_strided_slice %129 {offsets = [0, 16], sizes = [1, 8], strides = [1, 1]} : vector<1x32xf32> to vector<1x8xf32>
    %134 = arith.addf %132, %133 : vector<1x8xf32>
    %135 = vector.extract_strided_slice %129 {offsets = [0, 24], sizes = [1, 8], strides = [1, 1]} : vector<1x32xf32> to vector<1x8xf32>
    %136 = arith.addf %134, %135 : vector<1x8xf32>
    %cst_34 = arith.constant 3.200000e+01 : f32
    %137 = vector.broadcast %cst_34 : f32 to vector<1x8xf32>
    %138 = arith.divf %136, %137 : vector<1x8xf32>
    %cst_35 = arith.constant 9.99999974E-6 : f32
    %139 = vector.broadcast %cst_35 : f32 to vector<1x8xf32>
    %140 = arith.addf %138, %139 : vector<1x8xf32>
    %141 = math.rsqrt %140 : vector<1x8xf32>
    %142 = arith.mulf %10, %141 : vector<1x8xf32>
    %143 = tpu.concatenate %142, %142, %142, %142 in 1 : vector<1x8xf32>, vector<1x8xf32>, vector<1x8xf32>, vector<1x8xf32> -> vector<1x32xf32>
    %144 = tpu.concatenate %11, %11, %11, %11 in 1 : vector<1x8xf32>, vector<1x8xf32>, vector<1x8xf32>, vector<1x8xf32> -> vector<1x32xf32>
    %145 = vector.broadcast %143 : vector<1x32xf32> to vector<4x32xf32>
    %146 = arith.mulf %120, %145 : vector<4x32xf32>
    %147 = vector.broadcast %144 : vector<1x32xf32> to vector<4x32xf32>
    %148 = arith.addf %146, %147 : vector<4x32xf32>
    %cst_36 = arith.constant 0.000000e+00 : f32
    %149 = vector.broadcast %cst_36 : f32 to vector<4x32xf32>
    %150 = arith.cmpf oge, %148, %149 : vector<4x32xf32>
    %cst_37 = arith.constant 2.000000e-01 : f32
    %151 = vector.broadcast %cst_37 : f32 to vector<4x32xf32>
    %152 = arith.mulf %151, %148 : vector<4x32xf32>
    %153 = arith.select %150, %148, %152 : vector<4x32xi1>, vector<4x32xf32>
    %154 = vector.extract_strided_slice %153 {offsets = [0, 0], sizes = [1, 32], strides = [1, 1]} : vector<4x32xf32> to vector<1x32xf32>
    %155 = vector.extract_strided_slice %153 {offsets = [1, 0], sizes = [1, 32], strides = [1, 1]} : vector<4x32xf32> to vector<1x32xf32>
    %156 = vector.extract_strided_slice %153 {offsets = [2, 0], sizes = [1, 32], strides = [1, 1]} : vector<4x32xf32> to vector<1x32xf32>
    %157 = vector.extract_strided_slice %153 {offsets = [3, 0], sizes = [1, 32], strides = [1, 1]} : vector<4x32xf32> to vector<1x32xf32>
    %158 = tpu.concatenate %154, %155, %156, %157 in 1 : vector<1x32xf32>, vector<1x32xf32>, vector<1x32xf32>, vector<1x32xf32> -> vector<1x128xf32>
    %159 = vector.broadcast %143 : vector<1x32xf32> to vector<4x32xf32>
    %160 = arith.mulf %122, %159 : vector<4x32xf32>
    %161 = vector.broadcast %144 : vector<1x32xf32> to vector<4x32xf32>
    %162 = arith.addf %160, %161 : vector<4x32xf32>
    %cst_38 = arith.constant 0.000000e+00 : f32
    %163 = vector.broadcast %cst_38 : f32 to vector<4x32xf32>
    %164 = arith.cmpf oge, %162, %163 : vector<4x32xf32>
    %cst_39 = arith.constant 2.000000e-01 : f32
    %165 = vector.broadcast %cst_39 : f32 to vector<4x32xf32>
    %166 = arith.mulf %165, %162 : vector<4x32xf32>
    %167 = arith.select %164, %162, %166 : vector<4x32xi1>, vector<4x32xf32>
    %168 = vector.extract_strided_slice %167 {offsets = [0, 0], sizes = [1, 32], strides = [1, 1]} : vector<4x32xf32> to vector<1x32xf32>
    %169 = vector.extract_strided_slice %167 {offsets = [1, 0], sizes = [1, 32], strides = [1, 1]} : vector<4x32xf32> to vector<1x32xf32>
    %170 = vector.extract_strided_slice %167 {offsets = [2, 0], sizes = [1, 32], strides = [1, 1]} : vector<4x32xf32> to vector<1x32xf32>
    %171 = vector.extract_strided_slice %167 {offsets = [3, 0], sizes = [1, 32], strides = [1, 1]} : vector<4x32xf32> to vector<1x32xf32>
    %172 = tpu.concatenate %168, %169, %170, %171 in 1 : vector<1x32xf32>, vector<1x32xf32>, vector<1x32xf32>, vector<1x32xf32> -> vector<1x128xf32>
    %173 = tpu.concatenate %158, %172 in 0 : vector<1x128xf32>, vector<1x128xf32> -> vector<2x128xf32>
    %c0_40 = arith.constant 0 : index
    %c0_41 = arith.constant 0 : index
    %174 = vector.load %arg4[%c0_40, %c0_41] : memref<128x16xf32, #tpu.memory_space<vmem>>, vector<128x16xf32>
    %cst_42 = arith.constant dense<0.000000e+00> : vector<2x16xf32>
    %175 = tpu.matmul %173, %174, %cst_42 {dimension_numbers = #tpu.dot_dimension_numbers<[1], [0], [0], [1], [0, 0, 1, 1], [], []>} : vector<2x128xf32>, vector<128x16xf32>, vector<2x16xf32> -> vector<2x16xf32>
    %176 = vector.broadcast %12 : vector<1x16xf32> to vector<2x16xf32>
    %177 = arith.addf %175, %176 : vector<2x16xf32>
    %c0_43 = arith.constant 0 : index
    %c0_44 = arith.constant 0 : index
    %178 = vector.load %arg6[%c0_43, %c0_44] : memref<2x16xf32, #tpu.memory_space<vmem>>, vector<2x16xf32>
    tpu.vector_store %arg6[%c0_43, %c0_44], %177 {strides = array<i32>} : memref<2x16xf32, #tpu.memory_space<vmem>>, vector<2x16xf32>,
    return
  }
  func.func @transform_0(%arg0: i32) -> (i32, i32) {
    %c0_i32 = arith.constant 0 : i32
    %c0_i32_0 = arith.constant 0 : i32
    %c0_i32_1 = arith.constant 0 : i32
    return %c0_i32, %c0_i32_0 : i32, i32
  }
  func.func @transform_1(%arg0: i32) -> (i32, i32) {
    %c0_i32 = arith.constant 0 : i32
    %c0_i32_0 = arith.constant 0 : i32
    %c0_i32_1 = arith.constant 0 : i32
    return %c0_i32, %c0_i32_0 : i32, i32
  }
  func.func @transform_2(%arg0: i32) -> (i32, i32, i32) {
    %c0_i32 = arith.constant 0 : i32
    %c0_i32_0 = arith.constant 0 : i32
    %c0_i32_1 = arith.constant 0 : i32
    %c0_i32_2 = arith.constant 0 : i32
    return %c0_i32, %c0_i32_0, %c0_i32_1 : i32, i32, i32
  }
  func.func @transform_3(%arg0: i32) -> (i32, i32) {
    %c0_i32 = arith.constant 0 : i32
    %c0_i32_0 = arith.constant 0 : i32
    %c0_i32_1 = arith.constant 0 : i32
    return %c0_i32, %c0_i32_0 : i32, i32
  }
  func.func @transform_4(%arg0: i32) -> (i32, i32) {
    %c0_i32 = arith.constant 0 : i32
    %c0_i32_0 = arith.constant 0 : i32
    %c0_i32_1 = arith.constant 0 : i32
    return %c0_i32, %c0_i32_0 : i32, i32
  }
  func.func @transform_5(%arg0: i32) -> (i32, i32) {
    %c0_i32 = arith.constant 0 : i32
    %c0_i32_0 = arith.constant 0 : i32
    %c0_i32_1 = arith.constant 0 : i32
    return %c0_i32, %c0_i32_0 : i32, i32
  }
}

</mosaic_0001>

<llo_original>
// kernel: _lambda_.1
$region0: #{_lambda_.1}
  #allocation0 [shape = 'u32[]', space=smem, size = 0x4, offset = 0x4, fixed_abs, tag = 'smem constant byte address 0x4 - core index']
  #allocation1 [shape = 'u32[144,128]{1,0:T(1,128)}', space=vmem, size = 0x12000, scoped, tag = 'internal scratch']
  %s0 = inlined_call_operand.vmem [shape: f32[24,312], index: 0, kind: input, shape index: {}]
  %s1 = inlined_call_operand.vmem [shape: f32[312,48], index: 1, kind: input, shape index: {}]
  %s2 = inlined_call_operand.vmem [shape: f32[8,48,32], index: 2, kind: input, shape index: {}]
  %s3 = inlined_call_operand.vmem [shape: f32[128,16], index: 3, kind: input, shape index: {}]
  %s4 = inlined_call_operand.vmem [shape: f32[1,32], index: 4, kind: input, shape index: {}]
  %s5 = inlined_call_operand.vmem [shape: f32[2,16], index: 5, kind: output, shape index: {}]
  %s6 = sld [smem:[#allocation0]]
  $region30: #{_lambda_.1} parent=0
    _
  %s8 = ssub.s32 1, %s6
  %s9 = scalar_select 0, %s8, %s6
  // Predicated region
  $region2: #{_lambda_.1} parent=0 // pred_check
    _
  $region3: #{_lambda_.1} parent=0 // pred_check_branch
    %11 = sbr.rel (0) target = $region5
  $region4: #{_lambda_.1} parent=0 // pred_region
    _
  $region5: #{_lambda_.1} parent=0 // pred_fallthru
    _
  // Predicated region
  $region6: #{_lambda_.1} parent=0 // pred_check
    _
  $region7: #{_lambda_.1} parent=0 // pred_check_branch
    %13 = sbr.rel (0) target = $region9
  $region8: #{_lambda_.1} parent=0 // pred_region
    _
  $region9: #{_lambda_.1} parent=0 // pred_fallthru
    _
  // Predicated region
  $region10: #{_lambda_.1} parent=0 // pred_check
    _
  $region11: #{_lambda_.1} parent=0 // pred_check_branch
    %15 = sbr.rel (0) target = $region13
  $region12: #{_lambda_.1} parent=0 // pred_region
    _
  $region13: #{_lambda_.1} parent=0 // pred_fallthru
    _
  // Predicated region
  $region14: #{_lambda_.1} parent=0 // pred_check
    _
  $region15: #{_lambda_.1} parent=0 // pred_check_branch
    %17 = sbr.rel (0) target = $region17
  $region16: #{_lambda_.1} parent=0 // pred_region
    _
  $region17: #{_lambda_.1} parent=0 // pred_fallthru
    _
  // Predicated region
  $region18: #{_lambda_.1} parent=0 // pred_check
    _
  $region19: #{_lambda_.1} parent=0 // pred_check_branch
    %19 = sbr.rel (0) target = $region21
  $region20: #{_lambda_.1} parent=0 // pred_region
    _
  $region21: #{_lambda_.1} parent=0 // pred_fallthru
    _
  %v20 = vld [vmem:[%s0] sm:$0xff]
  %v21 = vld [vmem:[%s0 + $0x8] sm:$0xff]
  %v22 = vld [vmem:[%s0 + $0x10] sm:$0xff]
  %v23 = vld [vmem:[%s0 + $0x18] sm:$0xff]
  %v24 = vld [vmem:[%s0 + $0x20] sm:$0xff]
  %v25 = vld [vmem:[%s0 + $0x28] sm:$0xff]
  %v26 = vld [vmem:[%s0 + $0x30] sm:$0xff]
  %v27 = vld [vmem:[%s0 + $0x38] sm:$0xff]
  %v28 = vld [vmem:[%s0 + $0x40] sm:$0xff]
  %v29 = vld [vmem:[%s1] sm:$0xff]
  %v30 = vld [vmem:[%s1 + $0x8] sm:$0xff]
  %v31 = vld [vmem:[%s1 + $0x10] sm:$0xff]
  %v32 = vld [vmem:[%s1 + $0x18] sm:$0xff]
  %v33 = vld [vmem:[%s1 + $0x20] sm:$0xff]
  %v34 = vld [vmem:[%s1 + $0x28] sm:$0xff]
  %v35 = vld [vmem:[%s1 + $0x30] sm:$0xff]
  %v36 = vld [vmem:[%s1 + $0x38] sm:$0xff]
  %v37 = vld [vmem:[%s1 + $0x40] sm:$0xff]
  %v38 = vld [vmem:[%s1 + $0x48] sm:$0xff]
  %v39 = vld [vmem:[%s1 + $0x50] sm:$0xff]
  %v40 = vld [vmem:[%s1 + $0x58] sm:$0xff]
  %v41 = vld [vmem:[%s1 + $0x60] sm:$0xff]
  %v42 = vld [vmem:[%s1 + $0x68] sm:$0xff]
  %v43 = vld [vmem:[%s1 + $0x70] sm:$0xff]
  %v44 = vld [vmem:[%s1 + $0x78] sm:$0xff]
  %v45 = vld [vmem:[%s1 + $0x80] sm:$0xff]
  %v46 = vld [vmem:[%s1 + $0x88] sm:$0xff]
  %v47 = vld [vmem:[%s1 + $0x90] sm:$0xff]
  %v48 = vld [vmem:[%s1 + $0x98] sm:$0xff]
  %v49 = vld [vmem:[%s1 + $0xa0] sm:$0xff]
  %v50 = vld [vmem:[%s1 + $0xa8] sm:$0xff]
  %v51 = vld [vmem:[%s1 + $0xb0] sm:$0xff]
  %v52 = vld [vmem:[%s1 + $0xb8] sm:$0xff]
  %v53 = vld [vmem:[%s1 + $0xc0] sm:$0xff]
  %v54 = vld [vmem:[%s1 + $0xc8] sm:$0xff]
  %v55 = vld [vmem:[%s1 + $0xd0] sm:$0xff]
  %v56 = vld [vmem:[%s1 + $0xd8] sm:$0xff]
  %v57 = vld [vmem:[%s1 + $0xe0] sm:$0xff]
  %v58 = vld [vmem:[%s1 + $0xe8] sm:$0xff]
  %v59 = vld [vmem:[%s1 + $0xf0] sm:$0xff]
  %v60 = vld [vmem:[%s1 + $0xf8] sm:$0xff]
  %v61 = vld [vmem:[%s1 + $0x100] sm:$0xff]
  %v62 = vld [vmem:[%s1 + $0x108] sm:$0xff]
  %v63 = vld [vmem:[%s1 + $0x110] sm:$0xff]
  %v64 = vld [vmem:[%s1 + $0x118] sm:$0xff]
  %v65 = vld [vmem:[%s1 + $0x120] sm:$0xff]
  %v66 = vld [vmem:[%s1 + $0x128] sm:$0xff]
  %v67 = vld [vmem:[%s1 + $0x130] sm:$0xff]
  %vm68 = vcmask 457728
  %v70 = vsel %vm68, %v22, 0
  %v73 = vsel %vm68, %v25, 0
  %v76 = vsel %vm68, %v28, 0
  %78 = vmatprep.subr.mxu0 0.0
  %79 = vmatpush1.msra.mxu0 %v29
  %80 = vmatprep.subr.mxu0 0.0
  %81 = vmatpush1.msra.mxu0 %v30
  %82 = vmatprep.subr.mxu0 0.0
  %83 = vmatpush1.msra.mxu0 %v31
  %84 = vmatprep.subr.mxu0 0.0
  %85 = vmatpush1.msra.mxu0 %v32
  %86 = vmatprep.subr.mxu0 0.0
  %87 = vmatpush1.msra.mxu0 %v33
  %88 = vmatprep.subr.mxu0 0.0
  %89 = vmatpush1.msra.mxu0 %v34
  %90 = vmatprep.subr.mxu0 0.0
  %91 = vmatpush1.msra.mxu0 %v35
  %92 = vmatprep.subr.mxu0 0.0
  %93 = vmatpush1.msra.mxu0 %v36
  %94 = vmatprep.subr.mxu0 0.0
  %95 = vmatpush1.msra.mxu0 %v37
  %96 = vmatprep.subr.mxu0 0.0
  %97 = vmatpush1.msra.mxu0 %v38
  %98 = vmatprep.subr.mxu0 0.0
  %99 = vmatpush1.msra.mxu0 %v39
  %100 = vmatprep.subr.mxu0 0.0
  %101 = vmatpush1.msra.mxu0 %v40
  %102 = vmatprep.subr.mxu0 0.0
  %103 = vmatpush1.msra.mxu0 %v41
  %104 = vmatprep.subr.mxu0 0.0
  %105 = vmatpush1.msra.mxu0 %v42
  %106 = vmatprep.subr.mxu0 0.0
  %107 = vmatpush1.msra.mxu0 %v43
  %108 = vmatprep.subr.mxu0 0.0
  %109 = vmatpush1.msra.mxu0 %v44
  %110 = vmatprep.subr.mxu0 0.0
  %111 = vmatpush1.msra.mxu0 %v45
  %112 = vmatprep.subr.mxu0 0.0
  %113 = vmatpush1.msra.mxu0 %v46
  %114 = vmatprep.subr.mxu0 0.0
  %115 = vmatpush1.msra.mxu0 %v47
  %116 = vmatprep.subr.mxu0 0.0
  %117 = vmatpush1.msra.mxu0 %v48
  %118 = vmatprep.subr.mxu0 0.0
  %119 = vmatpush1.msra.mxu0 %v49
  %120 = vmatprep.subr.mxu0 0.0
  %121 = vmatpush1.msra.mxu0 %v50
  %122 = vmatprep.subr.mxu0 0.0
  %123 = vmatpush1.msra.mxu0 %v51
  %124 = vmatprep.subr.mxu0 0.0
  %125 = vmatpush1.msra.mxu0 %v52
  %126 = vmatprep.subr.mxu0 0.0
  %127 = vmatpush1.msra.mxu0 %v53
  %128 = vmatprep.subr.mxu0 0.0
  %129 = vmatpush1.msra.mxu0 %v54
  %130 = vmatprep.subr.mxu0 0.0
  %131 = vmatpush1.msra.mxu0 %v55
  %132 = vmatprep.subr.mxu0 0.0
  %133 = vmatpush1.msra.mxu0 %v56
  %134 = vmatprep.subr.mxu0 0.0
  %135 = vmatpush1.msra.mxu0 %v57
  %136 = vmatprep.subr.mxu0 0.0
  %137 = vmatpush1.msra.mxu0 %v58
  %138 = vmatprep.subr.mxu0 0.0
  %139 = vmatpush1.msra.mxu0 %v59
  %140 = vmatprep.subr.mxu0 0.0
  %141 = vmatpush1.msra.mxu0 %v60
  %142 = vmatprep.mubr.f32.mxu0 %v21
  %143 = vmatmul.mubr.f32.gmra.mrb[0].mxu0 %v20
  %v144 = vpop.f32.mrb[0].mxu0
  %v145 = vadd.f32 0.0, %v144
  %v146 = vpop.f32.mrb[0].mxu0
  %147 = vmatprep.mubr.f32.mxu0 %v24
  %148 = vmatmul.mubr.f32.gmra.mrb[0].mxu0 %v23
  %v149 = vpop.f32.mrb[0].mxu0
  %v150 = vadd.f32 0.0, %v149
  %v151 = vpop.f32.mrb[0].mxu0
  %152 = vmatprep.mubr.f32.mxu0 %v27
  %153 = vmatmul.mubr.f32.gmra.mrb[0].mxu0 %v26
  %v154 = vpop.f32.mrb[0].mxu0
  %v155 = vadd.f32 0.0, %v154
  %v156 = vpop.f32.mrb[0].mxu0
  %157 = vdwg.mxu0
  %158 = vmatprep.subr.mxu0 0.0
  %159 = vmatpush1.msra.mxu0 %v61
  %160 = vmatprep.subr.mxu0 0.0
  %161 = vmatpush1.msra.mxu0 %v62
  %162 = vmatprep.subr.mxu0 0.0
  %163 = vmatpush1.msra.mxu0 %v63
  %164 = vmatprep.subr.mxu0 0.0
  %165 = vmatpush1.msra.mxu0 %v64
  %166 = vmatprep.subr.mxu0 0.0
  %167 = vmatpush1.msra.mxu0 %v65
  %168 = vmatprep.subr.mxu0 0.0
  %169 = vmatpush1.msra.mxu0 %v66
  %170 = vmatprep.subr.mxu0 0.0
  %171 = vmatpush1.msra.mxu0 %v67
  %172 = vmatprep.subr.mxu0 0.0
  %173 = vmatpush1.msra.mxu0 0.0
  %174 = vmatprep.subr.mxu0 0.0
  %175 = vmatpush1.msra.mxu0 0.0
  %176 = vmatprep.subr.mxu0 0.0
  %177 = vmatpush1.msra.mxu0 0.0
  %178 = vmatprep.subr.mxu0 0.0
  %179 = vmatpush1.msra.mxu0 0.0
  %180 = vmatprep.subr.mxu0 0.0
  %181 = vmatpush1.msra.mxu0 0.0
  %182 = vmatprep.subr.mxu0 0.0
  %183 = vmatpush1.msra.mxu0 0.0
  %184 = vmatprep.subr.mxu0 0.0
  %185 = vmatpush1.msra.mxu0 0.0
  %186 = vmatprep.subr.mxu0 0.0
  %187 = vmatpush1.msra.mxu0 0.0
  %188 = vmatprep.subr.mxu0 0.0
  %189 = vmatpush1.msra.mxu0 0.0
  %190 = vmatprep.subr.mxu0 0.0
  %191 = vmatpush1.msra.mxu0 0.0
  %192 = vmatprep.subr.mxu0 0.0
  %193 = vmatpush1.msra.mxu0 0.0
  %194 = vmatprep.subr.mxu0 0.0
  %195 = vmatpush1.msra.mxu0 0.0
  %196 = vmatprep.subr.mxu0 0.0
  %197 = vmatpush1.msra.mxu0 0.0
  %198 = vmatprep.subr.mxu0 0.0
  %199 = vmatpush1.msra.mxu0 0.0
  %200 = vmatprep.subr.mxu0 0.0
  %201 = vmatpush1.msra.mxu0 0.0
  %202 = vmatprep.subr.mxu0 0.0
  %203 = vmatpush1.msra.mxu0 0.0
  %204 = vmatprep.subr.mxu0 0.0
  %205 = vmatpush1.msra.mxu0 0.0
  %206 = vmatprep.subr.mxu0 0.0
  %207 = vmatpush1.msra.mxu0 0.0
  %208 = vmatprep.subr.mxu0 0.0
  %209 = vmatpush1.msra.mxu0 0.0
  %210 = vmatprep.subr.mxu0 0.0
  %211 = vmatpush1.msra.mxu0 0.0
  %212 = vmatprep.subr.mxu0 0.0
  %213 = vmatpush1.msra.mxu0 0.0
  %214 = vmatprep.subr.mxu0 0.0
  %215 = vmatpush1.msra.mxu0 0.0
  %216 = vmatprep.subr.mxu0 0.0
  %217 = vmatpush1.msra.mxu0 0.0
  %218 = vmatprep.subr.mxu0 0.0
  %219 = vmatpush1.msra.mxu0 0.0
  %220 = vmatprep.subr.mxu0 0.0
  %221 = vmatpush1.msra.mxu0 0.0
  %222 = vmatprep.mubr.f32.mxu0 0.0
  %223 = vmatmul.mubr.f32.gmra.mrb[0].mxu0 %v70
  %v224 = vpop.f32.mrb[0].mxu0
  %v225 = vadd.f32 %v145, %v224
  %v226 = vpop.f32.mrb[0].mxu0
  %227 = vmatprep.mubr.f32.mxu0 0.0
  %228 = vmatmul.mubr.f32.gmra.mrb[0].mxu0 %v73
  %v229 = vpop.f32.mrb[0].mxu0
  %v230 = vadd.f32 %v150, %v229
  %v231 = vpop.f32.mrb[0].mxu0
  %232 = vmatprep.mubr.f32.mxu0 0.0
  %233 = vmatmul.mubr.f32.gmra.mrb[0].mxu0 %v76
  %v234 = vpop.f32.mrb[0].mxu0
  %v235 = vadd.f32 %v155, %v234
  %v236 = vpop.f32.mrb[0].mxu0
  %237 = vdwg.mxu0
  %vm238 = vcmp.ge.f32.partialorder %v225, 0.0
  %vm239 = vcmp.ge.f32.partialorder %v230, 0.0
  %vm240 = vcmp.ge.f32.partialorder %v235, 0.0
  %v241 = vmul.f32 %v225, 0.2
  %v242 = vmul.f32 %v230, 0.2
  %v243 = vmul.f32 %v235, 0.2
  %v244 = vsel %vm238, %v225, %v241
  %v245 = vsel %vm239, %v230, %v242
  %v246 = vsel %vm240, %v235, %v243
  %v247 = vld [vmem:[%s2] sm:$0xff]
  %v248 = vld [vmem:[%s2 + $0x8] sm:$0xff]
  %v249 = vld [vmem:[%s2 + $0x10] sm:$0xff]
  %v250 = vld [vmem:[%s2 + $0x18] sm:$0xff]
  %v251 = vld [vmem:[%s2 + $0x20] sm:$0xff]
  %v252 = vld [vmem:[%s2 + $0x28] sm:$0xff]
  %v253 = vld [vmem:[%s2 + $0x30] sm:$0xff]
  %v254 = vld [vmem:[%s2 + $0x38] sm:$0xff]
  %v255 = vld [vmem:[%s2 + $0x40] sm:$0xff]
  %v256 = vld [vmem:[%s2 + $0x48] sm:$0xff]
  %v257 = vld [vmem:[%s2 + $0x50] sm:$0xff]
  %v258 = vld [vmem:[%s2 + $0x58] sm:$0xff]
  %v259 = vld [vmem:[%s2 + $0x60] sm:$0xff]
  %v260 = vld [vmem:[%s2 + $0x68] sm:$0xff]
  %v261 = vld [vmem:[%s2 + $0x70] sm:$0xff]
  %v262 = vld [vmem:[%s2 + $0x78] sm:$0xff]
  %v263 = vld [vmem:[%s2 + $0x80] sm:$0xff]
  %v264 = vld [vmem:[%s2 + $0x88] sm:$0xff]
  %v265 = vld [vmem:[%s2 + $0x90] sm:$0xff]
  %v266 = vld [vmem:[%s2 + $0x98] sm:$0xff]
  %v267 = vld [vmem:[%s2 + $0xa0] sm:$0xff]
  %v268 = vld [vmem:[%s2 + $0xa8] sm:$0xff]
  %v269 = vld [vmem:[%s2 + $0xb0] sm:$0xff]
  %v270 = vld [vmem:[%s2 + $0xb8] sm:$0xff]
  %v271 = vld [vmem:[%s2 + $0xc0] sm:$0xff]
  %v272 = vld [vmem:[%s2 + $0xc8] sm:$0xff]
  %v273 = vld [vmem:[%s2 + $0xd0] sm:$0xff]
  %v274 = vld [vmem:[%s2 + $0xd8] sm:$0xff]
  %v275 = vld [vmem:[%s2 + $0xe0] sm:$0xff]
  %v276 = vld [vmem:[%s2 + $0xe8] sm:$0xff]
  %v277 = vld [vmem:[%s2 + $0xf0] sm:$0xff]
  %v278 = vld [vmem:[%s2 + $0xf8] sm:$0xff]
  %v279 = vld [vmem:[%s2 + $0x100] sm:$0xff]
  %v280 = vld [vmem:[%s2 + $0x108] sm:$0xff]
  %v281 = vld [vmem:[%s2 + $0x110] sm:$0xff]
  %v282 = vld [vmem:[%s2 + $0x118] sm:$0xff]
  %v283 = vld [vmem:[%s2 + $0x120] sm:$0xff]
  %v284 = vld [vmem:[%s2 + $0x128] sm:$0xff]
  %v285 = vld [vmem:[%s2 + $0x130] sm:$0xff]
  %v286 = vld [vmem:[%s2 + $0x138] sm:$0xff]
  %v287 = vld [vmem:[%s2 + $0x140] sm:$0xff]
  %v288 = vld [vmem:[%s2 + $0x148] sm:$0xff]
  %v289 = vld [vmem:[%s2 + $0x150] sm:$0xff]
  %v290 = vld [vmem:[%s2 + $0x158] sm:$0xff]
  %v291 = vld [vmem:[%s2 + $0x160] sm:$0xff]
  %v292 = vld [vmem:[%s2 + $0x168] sm:$0xff]
  %v293 = vld [vmem:[%s2 + $0x170] sm:$0xff]
  %v294 = vld [vmem:[%s2 + $0x178] sm:$0xff]
  %v295 = vld [vmem:[%s4] sm:$0x1]
  %v297 = vrot.slane %v244, 7
  %vm299 = vcmask 1040384
  %v300 = vsel %vm299, 0.0, %v297
  %vm303 = vcmask 1043456
  %v304 = vrot.slane %v245, 4
  %v305 = vrot.slane %v246, 4
  %v306 = vsel %vm303, %v304, %v305
  %vm308 = vcmask 1045504
  %v309 = vsel %vm308, %v306, 0.0
  %vm310 = vcmask 392192
  %v312 = vsel %vm310, %v309, 0
  %314 = vmatprep.subr.mxu0 0.0
  %315 = vmatpush1.msra.mxu0 %v253
  %316 = vmatprep.subr.mxu0 0.0
  %317 = vmatpush1.msra.mxu0 %v254
  %318 = vmatprep.subr.mxu0 0.0
  %319 = vmatpush1.msra.mxu0 %v255
  %320 = vmatprep.subr.mxu0 0.0
  %321 = vmatpush1.msra.mxu0 %v256
  %322 = vmatprep.subr.mxu0 0.0
  %323 = vmatpush1.msra.mxu0 %v257
  %324 = vmatprep.subr.mxu0 0.0
  %325 = vmatpush1.msra.mxu0 %v258
  %326 = vmatprep.subr.mxu0 0.0
  %327 = vmatpush1.msra.mxu0 0.0
  %328 = vmatprep.subr.mxu0 0.0
  %329 = vmatpush1.msra.mxu0 0.0
  %330 = vmatprep.subr.mxu0 0.0
  %331 = vmatpush1.msra.mxu0 0.0
  %332 = vmatprep.subr.mxu0 0.0
  %333 = vmatpush1.msra.mxu0 0.0
  %334 = vmatprep.subr.mxu0 0.0
  %335 = vmatpush1.msra.mxu0 0.0
  %336 = vmatprep.subr.mxu0 0.0
  %337 = vmatpush1.msra.mxu0 0.0
  %338 = vmatprep.subr.mxu0 0.0
  %339 = vmatpush1.msra.mxu0 0.0
  %340 = vmatprep.subr.mxu0 0.0
  %341 = vmatpush1.msra.mxu0 0.0
  %342 = vmatprep.subr.mxu0 0.0
  %343 = vmatpush1.msra.mxu0 0.0
  %344 = vmatprep.subr.mxu0 0.0
  %345 = vmatpush1.msra.mxu0 0.0
  %346 = vmatprep.subr.mxu0 0.0
  %347 = vmatpush1.msra.mxu0 0.0
  %348 = vmatprep.subr.mxu0 0.0
  %349 = vmatpush1.msra.mxu0 0.0
  %350 = vmatprep.subr.mxu0 0.0
  %351 = vmatpush1.msra.mxu0 0.0
  %352 = vmatprep.subr.mxu0 0.0
  %353 = vmatpush1.msra.mxu0 0.0
  %354 = vmatprep.subr.mxu0 0.0
  %355 = vmatpush1.msra.mxu0 0.0
  %356 = vmatprep.subr.mxu0 0.0
  %357 = vmatpush1.msra.mxu0 0.0
  %358 = vmatprep.subr.mxu0 0.0
  %359 = vmatpush1.msra.mxu0 0.0
  %360 = vmatprep.subr.mxu0 0.0
  %361 = vmatpush1.msra.mxu0 0.0
  %362 = vmatprep.subr.mxu0 0.0
  %363 = vmatpush1.msra.mxu0 0.0
  %364 = vmatprep.subr.mxu0 0.0
  %365 = vmatpush1.msra.mxu0 0.0
  %366 = vmatprep.subr.mxu0 0.0
  %367 = vmatpush1.msra.mxu0 0.0
  %368 = vmatprep.subr.mxu0 0.0
  %369 = vmatpush1.msra.mxu0 0.0
  %370 = vmatprep.subr.mxu0 0.0
  %371 = vmatpush1.msra.mxu0 0.0
  %372 = vmatprep.subr.mxu0 0.0
  %373 = vmatpush1.msra.mxu0 0.0
  %374 = vmatprep.subr.mxu0 0.0
  %375 = vmatpush1.msra.mxu0 0.0
  %376 = vmatprep.subr.mxu0 0.0
  %377 = vmatpush1.msra.mxu0 0.0
  %378 = vmatprep.mubr.f32.mxu0 0.0
  %379 = vmatmul.mubr.f32.gmra.mrb[0].mxu0 %v312
  %v380 = vpop.f32.mrb[0].mxu0
  %v381 = vadd.f32 0.0, %v380
  %v382 = vpop.f32.mrb[0].mxu0
  %383 = vdwg.mxu0
  %v385 = vsel %vm310, %v300, 0
  %387 = vmatprep.subr.mxu0 0.0
  %388 = vmatpush1.msra.mxu0 %v247
  %389 = vmatprep.subr.mxu0 0.0
  %390 = vmatpush1.msra.mxu0 %v248
  %391 = vmatprep.subr.mxu0 0.0
  %392 = vmatpush1.msra.mxu0 %v249
  %393 = vmatprep.subr.mxu0 0.0
  %394 = vmatpush1.msra.mxu0 %v250
  %395 = vmatprep.subr.mxu0 0.0
  %396 = vmatpush1.msra.mxu0 %v251
  %397 = vmatprep.subr.mxu0 0.0
  %398 = vmatpush1.msra.mxu0 %v252
  %399 = vmatprep.subr.mxu0 0.0
  %400 = vmatpush1.msra.mxu0 0.0
  %401 = vmatprep.subr.mxu0 0.0
  %402 = vmatpush1.msra.mxu0 0.0
  %403 = vmatprep.subr.mxu0 0.0
  %404 = vmatpush1.msra.mxu0 0.0
  %405 = vmatprep.subr.mxu0 0.0
  %406 = vmatpush1.msra.mxu0 0.0
  %407 = vmatprep.subr.mxu0 0.0
  %408 = vmatpush1.msra.mxu0 0.0
  %409 = vmatprep.subr.mxu0 0.0
  %410 = vmatpush1.msra.mxu0 0.0
  %411 = vmatprep.subr.mxu0 0.0
  %412 = vmatpush1.msra.mxu0 0.0
  %413 = vmatprep.subr.mxu0 0.0
  %414 = vmatpush1.msra.mxu0 0.0
  %415 = vmatprep.subr.mxu0 0.0
  %416 = vmatpush1.msra.mxu0 0.0
  %417 = vmatprep.subr.mxu0 0.0
  %418 = vmatpush1.msra.mxu0 0.0
  %419 = vmatprep.subr.mxu0 0.0
  %420 = vmatpush1.msra.mxu0 0.0
  %421 = vmatprep.subr.mxu0 0.0
  %422 = vmatpush1.msra.mxu0 0.0
  %423 = vmatprep.subr.mxu0 0.0
  %424 = vmatpush1.msra.mxu0 0.0
  %425 = vmatprep.subr.mxu0 0.0
  %426 = vmatpush1.msra.mxu0 0.0
  %427 = vmatprep.subr.mxu0 0.0
  %428 = vmatpush1.msra.mxu0 0.0
  %429 = vmatprep.subr.mxu0 0.0
  %430 = vmatpush1.msra.mxu0 0.0
  %431 = vmatprep.subr.mxu0 0.0
  %432 = vmatpush1.msra.mxu0 0.0
  %433 = vmatprep.subr.mxu0 0.0
  %434 = vmatpush1.msra.mxu0 0.0
  %435 = vmatprep.subr.mxu0 0.0
  %436 = vmatpush1.msra.mxu0 0.0
  %437 = vmatprep.subr.mxu0 0.0
  %438 = vmatpush1.msra.mxu0 0.0
  %439 = vmatprep.subr.mxu0 0.0
  %440 = vmatpush1.msra.mxu0 0.0
  %441 = vmatprep.subr.mxu0 0.0
  %442 = vmatpush1.msra.mxu0 0.0
  %443 = vmatprep.subr.mxu0 0.0
  %444 = vmatpush1.msra.mxu0 0.0
  %445 = vmatprep.subr.mxu0 0.0
  %446 = vmatpush1.msra.mxu0 0.0
  %447 = vmatprep.subr.mxu0 0.0
  %448 = vmatpush1.msra.mxu0 0.0
  %449 = vmatprep.subr.mxu0 0.0
  %450 = vmatpush1.msra.mxu0 0.0
  %451 = vmatprep.mubr.f32.mxu0 0.0
  %452 = vmatmul.mubr.f32.gmra.mrb[0].mxu0 %v385
  %v453 = vpop.f32.mrb[0].mxu0
  %v454 = vadd.f32 %v381, %v453
  %v455 = vpop.f32.mrb[0].mxu0
  %456 = vdwg.mxu0
  %v457 = vrot.slane %v300, 1
  %v458 = vsel %vm310, %v457, 0
  %460 = vmatprep.subr.mxu0 0.0
  %461 = vmatpush1.msra.mxu0 %v259
  %462 = vmatprep.subr.mxu0 0.0
  %463 = vmatpush1.msra.mxu0 %v260
  %464 = vmatprep.subr.mxu0 0.0
  %465 = vmatpush1.msra.mxu0 %v261
  %466 = vmatprep.subr.mxu0 0.0
  %467 = vmatpush1.msra.mxu0 %v262
  %468 = vmatprep.subr.mxu0 0.0
  %469 = vmatpush1.msra.mxu0 %v263
  %470 = vmatprep.subr.mxu0 0.0
  %471 = vmatpush1.msra.mxu0 %v264
  %472 = vmatprep.subr.mxu0 0.0
  %473 = vmatpush1.msra.mxu0 0.0
  %474 = vmatprep.subr.mxu0 0.0
  %475 = vmatpush1.msra.mxu0 0.0
  %476 = vmatprep.subr.mxu0 0.0
  %477 = vmatpush1.msra.mxu0 0.0
  %478 = vmatprep.subr.mxu0 0.0
  %479 = vmatpush1.msra.mxu0 0.0
  %480 = vmatprep.subr.mxu0 0.0
  %481 = vmatpush1.msra.mxu0 0.0
  %482 = vmatprep.subr.mxu0 0.0
  %483 = vmatpush1.msra.mxu0 0.0
  %484 = vmatprep.subr.mxu0 0.0
  %485 = vmatpush1.msra.mxu0 0.0
  %486 = vmatprep.subr.mxu0 0.0
  %487 = vmatpush1.msra.mxu0 0.0
  %488 = vmatprep.subr.mxu0 0.0
  %489 = vmatpush1.msra.mxu0 0.0
  %490 = vmatprep.subr.mxu0 0.0
  %491 = vmatpush1.msra.mxu0 0.0
  %492 = vmatprep.subr.mxu0 0.0
  %493 = vmatpush1.msra.mxu0 0.0
  %494 = vmatprep.subr.mxu0 0.0
  %495 = vmatpush1.msra.mxu0 0.0
  %496 = vmatprep.subr.mxu0 0.0
  %497 = vmatpush1.msra.mxu0 0.0
  %498 = vmatprep.subr.mxu0 0.0
  %499 = vmatpush1.msra.mxu0 0.0
  %500 = vmatprep.subr.mxu0 0.0
  %501 = vmatpush1.msra.mxu0 0.0
  %502 = vmatprep.subr.mxu0 0.0
  %503 = vmatpush1.msra.mxu0 0.0
  %504 = vmatprep.subr.mxu0 0.0
  %505 = vmatpush1.msra.mxu0 0.0
  %506 = vmatprep.subr.mxu0 0.0
  %507 = vmatpush1.msra.mxu0 0.0
  %508 = vmatprep.subr.mxu0 0.0
  %509 = vmatpush1.msra.mxu0 0.0
  %510 = vmatprep.subr.mxu0 0.0
  %511 = vmatpush1.msra.mxu0 0.0
  %512 = vmatprep.subr.mxu0 0.0
  %513 = vmatpush1.msra.mxu0 0.0
  %514 = vmatprep.subr.mxu0 0.0
  %515 = vmatpush1.msra.mxu0 0.0
  %516 = vmatprep.subr.mxu0 0.0
  %517 = vmatpush1.msra.mxu0 0.0
  %518 = vmatprep.subr.mxu0 0.0
  %519 = vmatpush1.msra.mxu0 0.0
  %520 = vmatprep.subr.mxu0 0.0
  %521 = vmatpush1.msra.mxu0 0.0
  %522 = vmatprep.subr.mxu0 0.0
  %523 = vmatpush1.msra.mxu0 0.0
  %524 = vmatprep.mubr.f32.mxu0 0.0
  %525 = vmatmul.mubr.f32.gmra.mrb[0].mxu0 %v458
  %v526 = vpop.f32.mrb[0].mxu0
  %v527 = vadd.f32 0.0, %v526
  %v528 = vpop.f32.mrb[0].mxu0
  %529 = vdwg.mxu0
  %v530 = vadd.f32 %v454, %v527
  %v531 = vrot.slane %v309, 1
  %v532 = vsel %vm310, %v531, 0
  %534 = vmatprep.subr.mxu0 0.0
  %535 = vmatpush1.msra.mxu0 %v265
  %536 = vmatprep.subr.mxu0 0.0
  %537 = vmatpush1.msra.mxu0 %v266
  %538 = vmatprep.subr.mxu0 0.0
  %539 = vmatpush1.msra.mxu0 %v267
  %540 = vmatprep.subr.mxu0 0.0
  %541 = vmatpush1.msra.mxu0 %v268
  %542 = vmatprep.subr.mxu0 0.0
  %543 = vmatpush1.msra.mxu0 %v269
  %544 = vmatprep.subr.mxu0 0.0
  %545 = vmatpush1.msra.mxu0 %v270
  %546 = vmatprep.subr.mxu0 0.0
  %547 = vmatpush1.msra.mxu0 0.0
  %548 = vmatprep.subr.mxu0 0.0
  %549 = vmatpush1.msra.mxu0 0.0
  %550 = vmatprep.subr.mxu0 0.0
  %551 = vmatpush1.msra.mxu0 0.0
  %552 = vmatprep.subr.mxu0 0.0
  %553 = vmatpush1.msra.mxu0 0.0
  %554 = vmatprep.subr.mxu0 0.0
  %555 = vmatpush1.msra.mxu0 0.0
  %556 = vmatprep.subr.mxu0 0.0
  %557 = vmatpush1.msra.mxu0 0.0
  %558 = vmatprep.subr.mxu0 0.0
  %559 = vmatpush1.msra.mxu0 0.0
  %560 = vmatprep.subr.mxu0 0.0
  %561 = vmatpush1.msra.mxu0 0.0
  %562 = vmatprep.subr.mxu0 0.0
  %563 = vmatpush1.msra.mxu0 0.0
  %564 = vmatprep.subr.mxu0 0.0
  %565 = vmatpush1.msra.mxu0 0.0
  %566 = vmatprep.subr.mxu0 0.0
  %567 = vmatpush1.msra.mxu0 0.0
  %568 = vmatprep.subr.mxu0 0.0
  %569 = vmatpush1.msra.mxu0 0.0
  %570 = vmatprep.subr.mxu0 0.0
  %571 = vmatpush1.msra.mxu0 0.0
  %572 = vmatprep.subr.mxu0 0.0
  %573 = vmatpush1.msra.mxu0 0.0
  %574 = vmatprep.subr.mxu0 0.0
  %575 = vmatpush1.msra.mxu0 0.0
  %576 = vmatprep.subr.mxu0 0.0
  %577 = vmatpush1.msra.mxu0 0.0
  %578 = vmatprep.subr.mxu0 0.0
  %579 = vmatpush1.msra.mxu0 0.0
  %580 = vmatprep.subr.mxu0 0.0
  %581 = vmatpush1.msra.mxu0 0.0
  %582 = vmatprep.subr.mxu0 0.0
  %583 = vmatpush1.msra.mxu0 0.0
  %584 = vmatprep.subr.mxu0 0.0
  %585 = vmatpush1.msra.mxu0 0.0
  %586 = vmatprep.subr.mxu0 0.0
  %587 = vmatpush1.msra.mxu0 0.0
  %588 = vmatprep.subr.mxu0 0.0
  %589 = vmatpush1.msra.mxu0 0.0
  %590 = vmatprep.subr.mxu0 0.0
  %591 = vmatpush1.msra.mxu0 0.0
  %592 = vmatprep.subr.mxu0 0.0
  %593 = vmatpush1.msra.mxu0 0.0
  %594 = vmatprep.subr.mxu0 0.0
  %595 = vmatpush1.msra.mxu0 0.0
  %596 = vmatprep.subr.mxu0 0.0
  %597 = vmatpush1.msra.mxu0 0.0
  %598 = vmatprep.mubr.f32.mxu0 0.0
  %599 = vmatmul.mubr.f32.gmra.mrb[0].mxu0 %v532
  %v600 = vpop.f32.mrb[0].mxu0
  %v601 = vadd.f32 0.0, %v600
  %v602 = vpop.f32.mrb[0].mxu0
  %603 = vdwg.mxu0
  %v604 = vadd.f32 %v530, %v601
  %v605 = vrot.slane %v300, 2
  %v606 = vsel %vm310, %v605, 0
  %608 = vmatprep.subr.mxu0 0.0
  %609 = vmatpush1.msra.mxu0 %v271
  %610 = vmatprep.subr.mxu0 0.0
  %611 = vmatpush1.msra.mxu0 %v272
  %612 = vmatprep.subr.mxu0 0.0
  %613 = vmatpush1.msra.mxu0 %v273
  %614 = vmatprep.subr.mxu0 0.0
  %615 = vmatpush1.msra.mxu0 %v274
  %616 = vmatprep.subr.mxu0 0.0
  %617 = vmatpush1.msra.mxu0 %v275
  %618 = vmatprep.subr.mxu0 0.0
  %619 = vmatpush1.msra.mxu0 %v276
  %620 = vmatprep.subr.mxu0 0.0
  %621 = vmatpush1.msra.mxu0 0.0
  %622 = vmatprep.subr.mxu0 0.0
  %623 = vmatpush1.msra.mxu0 0.0
  %624 = vmatprep.subr.mxu0 0.0
  %625 = vmatpush1.msra.mxu0 0.0
  %626 = vmatprep.subr.mxu0 0.0
  %627 = vmatpush1.msra.mxu0 0.0
  %628 = vmatprep.subr.mxu0 0.0
  %629 = vmatpush1.msra.mxu0 0.0
  %630 = vmatprep.subr.mxu0 0.0
  %631 = vmatpush1.msra.mxu0 0.0
  %632 = vmatprep.subr.mxu0 0.0
  %633 = vmatpush1.msra.mxu0 0.0
  %634 = vmatprep.subr.mxu0 0.0
  %635 = vmatpush1.msra.mxu0 0.0
  %636 = vmatprep.subr.mxu0 0.0
  %637 = vmatpush1.msra.mxu0 0.0
  %638 = vmatprep.subr.mxu0 0.0
  %639 = vmatpush1.msra.mxu0 0.0
  %640 = vmatprep.subr.mxu0 0.0
  %641 = vmatpush1.msra.mxu0 0.0
  %642 = vmatprep.subr.mxu0 0.0
  %643 = vmatpush1.msra.mxu0 0.0
  %644 = vmatprep.subr.mxu0 0.0
  %645 = vmatpush1.msra.mxu0 0.0
  %646 = vmatprep.subr.mxu0 0.0
  %647 = vmatpush1.msra.mxu0 0.0
  %648 = vmatprep.subr.mxu0 0.0
  %649 = vmatpush1.msra.mxu0 0.0
  %650 = vmatprep.subr.mxu0 0.0
  %651 = vmatpush1.msra.mxu0 0.0
  %652 = vmatprep.subr.mxu0 0.0
  %653 = vmatpush1.msra.mxu0 0.0
  %654 = vmatprep.subr.mxu0 0.0
  %655 = vmatpush1.msra.mxu0 0.0
  %656 = vmatprep.subr.mxu0 0.0
  %657 = vmatpush1.msra.mxu0 0.0
  %658 = vmatprep.subr.mxu0 0.0
  %659 = vmatpush1.msra.mxu0 0.0
  %660 = vmatprep.subr.mxu0 0.0
  %661 = vmatpush1.msra.mxu0 0.0
  %662 = vmatprep.subr.mxu0 0.0
  %663 = vmatpush1.msra.mxu0 0.0
  %664 = vmatprep.subr.mxu0 0.0
  %665 = vmatpush1.msra.mxu0 0.0
  %666 = vmatprep.subr.mxu0 0.0
  %667 = vmatpush1.msra.mxu0 0.0
  %668 = vmatprep.subr.mxu0 0.0
  %669 = vmatpush1.msra.mxu0 0.0
  %670 = vmatprep.subr.mxu0 0.0
  %671 = vmatpush1.msra.mxu0 0.0
  %672 = vmatprep.mubr.f32.mxu0 0.0
  %673 = vmatmul.mubr.f32.gmra.mrb[0].mxu0 %v606
  %v674 = vpop.f32.mrb[0].mxu0
  %v675 = vadd.f32 0.0, %v674
  %v676 = vpop.f32.mrb[0].mxu0
  %677 = vdwg.mxu0
  %v678 = vadd.f32 %v604, %v675
  %v679 = vrot.slane %v309, 2
  %v680 = vsel %vm310, %v679, 0
  %682 = vmatprep.subr.mxu0 0.0
  %683 = vmatpush1.msra.mxu0 %v277
  %684 = vmatprep.subr.mxu0 0.0
  %685 = vmatpush1.msra.mxu0 %v278
  %686 = vmatprep.subr.mxu0 0.0
  %687 = vmatpush1.msra.mxu0 %v279
  %688 = vmatprep.subr.mxu0 0.0
  %689 = vmatpush1.msra.mxu0 %v280
  %690 = vmatprep.subr.mxu0 0.0
  %691 = vmatpush1.msra.mxu0 %v281
  %692 = vmatprep.subr.mxu0 0.0
  %693 = vmatpush1.msra.mxu0 %v282
  %694 = vmatprep.subr.mxu0 0.0
  %695 = vmatpush1.msra.mxu0 0.0
  %696 = vmatprep.subr.mxu0 0.0
  %697 = vmatpush1.msra.mxu0 0.0
  %698 = vmatprep.subr.mxu0 0.0
  %699 = vmatpush1.msra.mxu0 0.0
  %700 = vmatprep.subr.mxu0 0.0
  %701 = vmatpush1.msra.mxu0 0.0
  %702 = vmatprep.subr.mxu0 0.0
  %703 = vmatpush1.msra.mxu0 0.0
  %704 = vmatprep.subr.mxu0 0.0
  %705 = vmatpush1.msra.mxu0 0.0
  %706 = vmatprep.subr.mxu0 0.0
  %707 = vmatpush1.msra.mxu0 0.0
  %708 = vmatprep.subr.mxu0 0.0
  %709 = vmatpush1.msra.mxu0 0.0
  %710 = vmatprep.subr.mxu0 0.0
  %711 = vmatpush1.msra.mxu0 0.0
  %712 = vmatprep.subr.mxu0 0.0
  %713 = vmatpush1.msra.mxu0 0.0
  %714 = vmatprep.subr.mxu0 0.0
  %715 = vmatpush1.msra.mxu0 0.0
  %716 = vmatprep.subr.mxu0 0.0
  %717 = vmatpush1.msra.mxu0 0.0
  %718 = vmatprep.subr.mxu0 0.0
  %719 = vmatpush1.msra.mxu0 0.0
  %720 = vmatprep.subr.mxu0 0.0
  %721 = vmatpush1.msra.mxu0 0.0
  %722 = vmatprep.subr.mxu0 0.0
  %723 = vmatpush1.msra.mxu0 0.0
  %724 = vmatprep.subr.mxu0 0.0
  %725 = vmatpush1.msra.mxu0 0.0
  %726 = vmatprep.subr.mxu0 0.0
  %727 = vmatpush1.msra.mxu0 0.0
  %728 = vmatprep.subr.mxu0 0.0
  %729 = vmatpush1.msra.mxu0 0.0
  %730 = vmatprep.subr.mxu0 0.0
  %731 = vmatpush1.msra.mxu0 0.0
  %732 = vmatprep.subr.mxu0 0.0
  %733 = vmatpush1.msra.mxu0 0.0
  %734 = vmatprep.subr.mxu0 0.0
  %735 = vmatpush1.msra.mxu0 0.0
  %736 = vmatprep.subr.mxu0 0.0
  %737 = vmatpush1.msra.mxu0 0.0
  %738 = vmatprep.subr.mxu0 0.0
  %739 = vmatpush1.msra.mxu0 0.0
  %740 = vmatprep.subr.mxu0 0.0
  %741 = vmatpush1.msra.mxu0 0.0
  %742 = vmatprep.subr.mxu0 0.0
  %743 = vmatpush1.msra.mxu0 0.0
  %744 = vmatprep.subr.mxu0 0.0
  %745 = vmatpush1.msra.mxu0 0.0
  %746 = vmatprep.mubr.f32.mxu0 0.0
  %747 = vmatmul.mubr.f32.gmra.mrb[0].mxu0 %v680
  %v748 = vpop.f32.mrb[0].mxu0
  %v749 = vadd.f32 0.0, %v748
  %v750 = vpop.f32.mrb[0].mxu0
  %751 = vdwg.mxu0
  %v752 = vadd.f32 %v678, %v749
  %v753 = vrot.slane %v300, 3
  %v754 = vsel %vm310, %v753, 0
  %756 = vmatprep.subr.mxu0 0.0
  %757 = vmatpush1.msra.mxu0 %v283
  %758 = vmatprep.subr.mxu0 0.0
  %759 = vmatpush1.msra.mxu0 %v284
  %760 = vmatprep.subr.mxu0 0.0
  %761 = vmatpush1.msra.mxu0 %v285
  %762 = vmatprep.subr.mxu0 0.0
  %763 = vmatpush1.msra.mxu0 %v286
  %764 = vmatprep.subr.mxu0 0.0
  %765 = vmatpush1.msra.mxu0 %v287
  %766 = vmatprep.subr.mxu0 0.0
  %767 = vmatpush1.msra.mxu0 %v288
  %768 = vmatprep.subr.mxu0 0.0
  %769 = vmatpush1.msra.mxu0 0.0
  %770 = vmatprep.subr.mxu0 0.0
  %771 = vmatpush1.msra.mxu0 0.0
  %772 = vmatprep.subr.mxu0 0.0
  %773 = vmatpush1.msra.mxu0 0.0
  %774 = vmatprep.subr.mxu0 0.0
  %775 = vmatpush1.msra.mxu0 0.0
  %776 = vmatprep.subr.mxu0 0.0
  %777 = vmatpush1.msra.mxu0 0.0
  %778 = vmatprep.subr.mxu0 0.0
  %779 = vmatpush1.msra.mxu0 0.0
  %780 = vmatprep.subr.mxu0 0.0
  %781 = vmatpush1.msra.mxu0 0.0
  %782 = vmatprep.subr.mxu0 0.0
  %783 = vmatpush1.msra.mxu0 0.0
  %784 = vmatprep.subr.mxu0 0.0
  %785 = vmatpush1.msra.mxu0 0.0
  %786 = vmatprep.subr.mxu0 0.0
  %787 = vmatpush1.msra.mxu0 0.0
  %788 = vmatprep.subr.mxu0 0.0
  %789 = vmatpush1.msra.mxu0 0.0
  %790 = vmatprep.subr.mxu0 0.0
  %791 = vmatpush1.msra.mxu0 0.0
  %792 = vmatprep.subr.mxu0 0.0
  %793 = vmatpush1.msra.mxu0 0.0
  %794 = vmatprep.subr.mxu0 0.0
  %795 = vmatpush1.msra.mxu0 0.0
  %796 = vmatprep.subr.mxu0 0.0
  %797 = vmatpush1.msra.mxu0 0.0
  %798 = vmatprep.subr.mxu0 0.0
  %799 = vmatpush1.msra.mxu0 0.0
  %800 = vmatprep.subr.mxu0 0.0
  %801 = vmatpush1.msra.mxu0 0.0
  %802 = vmatprep.subr.mxu0 0.0
  %803 = vmatpush1.msra.mxu0 0.0
  %804 = vmatprep.subr.mxu0 0.0
  %805 = vmatpush1.msra.mxu0 0.0
  %806 = vmatprep.subr.mxu0 0.0
  %807 = vmatpush1.msra.mxu0 0.0
  %808 = vmatprep.subr.mxu0 0.0
  %809 = vmatpush1.msra.mxu0 0.0
  %810 = vmatprep.subr.mxu0 0.0
  %811 = vmatpush1.msra.mxu0 0.0
  %812 = vmatprep.subr.mxu0 0.0
  %813 = vmatpush1.msra.mxu0 0.0
  %814 = vmatprep.subr.mxu0 0.0
  %815 = vmatpush1.msra.mxu0 0.0
  %816 = vmatprep.subr.mxu0 0.0
  %817 = vmatpush1.msra.mxu0 0.0
  %818 = vmatprep.subr.mxu0 0.0
  %819 = vmatpush1.msra.mxu0 0.0
  %820 = vmatprep.mubr.f32.mxu0 0.0
  %821 = vmatmul.mubr.f32.gmra.mrb[0].mxu0 %v754
  %v822 = vpop.f32.mrb[0].mxu0
  %v823 = vadd.f32 0.0, %v822
  %v824 = vpop.f32.mrb[0].mxu0
  %825 = vdwg.mxu0
  %v826 = vadd.f32 %v752, %v823
  %v827 = vrot.slane %v309, 3
  %v828 = vsel %vm310, %v827, 0
  %830 = vmatprep.subr.mxu0 0.0
  %831 = vmatpush1.msra.mxu0 %v289
  %832 = vmatprep.subr.mxu0 0.0
  %833 = vmatpush1.msra.mxu0 %v290
  %834 = vmatprep.subr.mxu0 0.0
  %835 = vmatpush1.msra.mxu0 %v291
  %836 = vmatprep.subr.mxu0 0.0
  %837 = vmatpush1.msra.mxu0 %v292
  %838 = vmatprep.subr.mxu0 0.0
  %839 = vmatpush1.msra.mxu0 %v293
  %840 = vmatprep.subr.mxu0 0.0
  %841 = vmatpush1.msra.mxu0 %v294
  %842 = vmatprep.subr.mxu0 0.0
  %843 = vmatpush1.msra.mxu0 0.0
  %844 = vmatprep.subr.mxu0 0.0
  %845 = vmatpush1.msra.mxu0 0.0
  %846 = vmatprep.subr.mxu0 0.0
  %847 = vmatpush1.msra.mxu0 0.0
  %848 = vmatprep.subr.mxu0 0.0
  %849 = vmatpush1.msra.mxu0 0.0
  %850 = vmatprep.subr.mxu0 0.0
  %851 = vmatpush1.msra.mxu0 0.0
  %852 = vmatprep.subr.mxu0 0.0
  %853 = vmatpush1.msra.mxu0 0.0
  %854 = vmatprep.subr.mxu0 0.0
  %855 = vmatpush1.msra.mxu0 0.0
  %856 = vmatprep.subr.mxu0 0.0
  %857 = vmatpush1.msra.mxu0 0.0
  %858 = vmatprep.subr.mxu0 0.0
  %859 = vmatpush1.msra.mxu0 0.0
  %860 = vmatprep.subr.mxu0 0.0
  %861 = vmatpush1.msra.mxu0 0.0
  %862 = vmatprep.subr.mxu0 0.0
  %863 = vmatpush1.msra.mxu0 0.0
  %864 = vmatprep.subr.mxu0 0.0
  %865 = vmatpush1.msra.mxu0 0.0
  %866 = vmatprep.subr.mxu0 0.0
  %867 = vmatpush1.msra.mxu0 0.0
  %868 = vmatprep.subr.mxu0 0.0
  %869 = vmatpush1.msra.mxu0 0.0
  %870 = vmatprep.subr.mxu0 0.0
  %871 = vmatpush1.msra.mxu0 0.0
  %872 = vmatprep.subr.mxu0 0.0
  %873 = vmatpush1.msra.mxu0 0.0
  %874 = vmatprep.subr.mxu0 0.0
  %875 = vmatpush1.msra.mxu0 0.0
  %876 = vmatprep.subr.mxu0 0.0
  %877 = vmatpush1.msra.mxu0 0.0
  %878 = vmatprep.subr.mxu0 0.0
  %879 = vmatpush1.msra.mxu0 0.0
  %880 = vmatprep.subr.mxu0 0.0
  %881 = vmatpush1.msra.mxu0 0.0
  %882 = vmatprep.subr.mxu0 0.0
  %883 = vmatpush1.msra.mxu0 0.0
  %884 = vmatprep.subr.mxu0 0.0
  %885 = vmatpush1.msra.mxu0 0.0
  %886 = vmatprep.subr.mxu0 0.0
  %887 = vmatpush1.msra.mxu0 0.0
  %888 = vmatprep.subr.mxu0 0.0
  %889 = vmatpush1.msra.mxu0 0.0
  %890 = vmatprep.subr.mxu0 0.0
  %891 = vmatpush1.msra.mxu0 0.0
  %892 = vmatprep.subr.mxu0 0.0
  %893 = vmatpush1.msra.mxu0 0.0
  %894 = vmatprep.mubr.f32.mxu0 0.0
  %895 = vmatmul.mubr.f32.gmra.mrb[0].mxu0 %v828
  %v896 = vpop.f32.mrb[0].mxu0
  %v897 = vadd.f32 0.0, %v896
  %v898 = vpop.f32.mrb[0].mxu0
  %899 = vdwg.mxu0
  %v900 = vadd.f32 %v826, %v897
  %vm901 = vcmask 1042432
  %v902 = vrot.slane %v244, 5
  %v903 = vrot.slane %v245, 5
  %v904 = vsel %vm901, %v902, %v903
  %v906 = vsel %vm299, 0.0, %v904
  %v907 = vrot.slane %v246, 2
  %v909 = vsel %vm308, %v907, 0.0
  %v911 = vsel %vm310, %v909, 0
  %913 = vmatprep.subr.mxu0 0.0
  %914 = vmatpush1.msra.mxu0 %v253
  %915 = vmatprep.subr.mxu0 0.0
  %916 = vmatpush1.msra.mxu0 %v254
  %917 = vmatprep.subr.mxu0 0.0
  %918 = vmatpush1.msra.mxu0 %v255
  %919 = vmatprep.subr.mxu0 0.0
  %920 = vmatpush1.msra.mxu0 %v256
  %921 = vmatprep.subr.mxu0 0.0
  %922 = vmatpush1.msra.mxu0 %v257
  %923 = vmatprep.subr.mxu0 0.0
  %924 = vmatpush1.msra.mxu0 %v258
  %925 = vmatprep.subr.mxu0 0.0
  %926 = vmatpush1.msra.mxu0 0.0
  %927 = vmatprep.subr.mxu0 0.0
  %928 = vmatpush1.msra.mxu0 0.0
  %929 = vmatprep.subr.mxu0 0.0
  %930 = vmatpush1.msra.mxu0 0.0
  %931 = vmatprep.subr.mxu0 0.0
  %932 = vmatpush1.msra.mxu0 0.0
  %933 = vmatprep.subr.mxu0 0.0
  %934 = vmatpush1.msra.mxu0 0.0
  %935 = vmatprep.subr.mxu0 0.0
  %936 = vmatpush1.msra.mxu0 0.0
  %937 = vmatprep.subr.mxu0 0.0
  %938 = vmatpush1.msra.mxu0 0.0
  %939 = vmatprep.subr.mxu0 0.0
  %940 = vmatpush1.msra.mxu0 0.0
  %941 = vmatprep.subr.mxu0 0.0
  %942 = vmatpush1.msra.mxu0 0.0
  %943 = vmatprep.subr.mxu0 0.0
  %944 = vmatpush1.msra.mxu0 0.0
  %945 = vmatprep.subr.mxu0 0.0
  %946 = vmatpush1.msra.mxu0 0.0
  %947 = vmatprep.subr.mxu0 0.0
  %948 = vmatpush1.msra.mxu0 0.0
  %949 = vmatprep.subr.mxu0 0.0
  %950 = vmatpush1.msra.mxu0 0.0
  %951 = vmatprep.subr.mxu0 0.0
  %952 = vmatpush1.msra.mxu0 0.0
  %953 = vmatprep.subr.mxu0 0.0
  %954 = vmatpush1.msra.mxu0 0.0
  %955 = vmatprep.subr.mxu0 0.0
  %956 = vmatpush1.msra.mxu0 0.0
  %957 = vmatprep.subr.mxu0 0.0
  %958 = vmatpush1.msra.mxu0 0.0
  %959 = vmatprep.subr.mxu0 0.0
  %960 = vmatpush1.msra.mxu0 0.0
  %961 = vmatprep.subr.mxu0 0.0
  %962 = vmatpush1.msra.mxu0 0.0
  %963 = vmatprep.subr.mxu0 0.0
  %964 = vmatpush1.msra.mxu0 0.0
  %965 = vmatprep.subr.mxu0 0.0
  %966 = vmatpush1.msra.mxu0 0.0
  %967 = vmatprep.subr.mxu0 0.0
  %968 = vmatpush1.msra.mxu0 0.0
  %969 = vmatprep.subr.mxu0 0.0
  %970 = vmatpush1.msra.mxu0 0.0
  %971 = vmatprep.subr.mxu0 0.0
  %972 = vmatpush1.msra.mxu0 0.0
  %973 = vmatprep.subr.mxu0 0.0
  %974 = vmatpush1.msra.mxu0 0.0
  %975 = vmatprep.subr.mxu0 0.0
  %976 = vmatpush1.msra.mxu0 0.0
  %977 = vmatprep.mubr.f32.mxu0 0.0
  %978 = vmatmul.mubr.f32.gmra.mrb[0].mxu0 %v911
  %v979 = vpop.f32.mrb[0].mxu0
  %v980 = vadd.f32 0.0, %v979
  %v981 = vpop.f32.mrb[0].mxu0
  %982 = vdwg.mxu0
  %v984 = vsel %vm310, %v906, 0
  %986 = vmatprep.subr.mxu0 0.0
  %987 = vmatpush1.msra.mxu0 %v247
  %988 = vmatprep.subr.mxu0 0.0
  %989 = vmatpush1.msra.mxu0 %v248
  %990 = vmatprep.subr.mxu0 0.0
  %991 = vmatpush1.msra.mxu0 %v249
  %992 = vmatprep.subr.mxu0 0.0
  %993 = vmatpush1.msra.mxu0 %v250
  %994 = vmatprep.subr.mxu0 0.0
  %995 = vmatpush1.msra.mxu0 %v251
  %996 = vmatprep.subr.mxu0 0.0
  %997 = vmatpush1.msra.mxu0 %v252
  %998 = vmatprep.subr.mxu0 0.0
  %999 = vmatpush1.msra.mxu0 0.0
  %1000 = vmatprep.subr.mxu0 0.0
  %1001 = vmatpush1.msra.mxu0 0.0
  %1002 = vmatprep.subr.mxu0 0.0
  %1003 = vmatpush1.msra.mxu0 0.0
  %1004 = vmatprep.subr.mxu0 0.0
  %1005 = vmatpush1.msra.mxu0 0.0
  %1006 = vmatprep.subr.mxu0 0.0
  %1007 = vmatpush1.msra.mxu0 0.0
  %1008 = vmatprep.subr.mxu0 0.0
  %1009 = vmatpush1.msra.mxu0 0.0
  %1010 = vmatprep.subr.mxu0 0.0
  %1011 = vmatpush1.msra.mxu0 0.0
  %1012 = vmatprep.subr.mxu0 0.0
  %1013 = vmatpush1.msra.mxu0 0.0
  %1014 = vmatprep.subr.mxu0 0.0
  %1015 = vmatpush1.msra.mxu0 0.0
  %1016 = vmatprep.subr.mxu0 0.0
  %1017 = vmatpush1.msra.mxu0 0.0
  %1018 = vmatprep.subr.mxu0 0.0
  %1019 = vmatpush1.msra.mxu0 0.0
  %1020 = vmatprep.subr.mxu0 0.0
  %1021 = vmatpush1.msra.mxu0 0.0
  %1022 = vmatprep.subr.mxu0 0.0
  %1023 = vmatpush1.msra.mxu0 0.0
  %1024 = vmatprep.subr.mxu0 0.0
  %1025 = vmatpush1.msra.mxu0 0.0
  %1026 = vmatprep.subr.mxu0 0.0
  %1027 = vmatpush1.msra.mxu0 0.0
  %1028 = vmatprep.subr.mxu0 0.0
  %1029 = vmatpush1.msra.mxu0 0.0
  %1030 = vmatprep.subr.mxu0 0.0
  %1031 = vmatpush1.msra.mxu0 0.0
  %1032 = vmatprep.subr.mxu0 0.0
  %1033 = vmatpush1.msra.mxu0 0.0
  %1034 = vmatprep.subr.mxu0 0.0
  %1035 = vmatpush1.msra.mxu0 0.0
  %1036 = vmatprep.subr.mxu0 0.0
  %1037 = vmatpush1.msra.mxu0 0.0
  %1038 = vmatprep.subr.mxu0 0.0
  %1039 = vmatpush1.msra.mxu0 0.0
  %1040 = vmatprep.subr.mxu0 0.0
  %1041 = vmatpush1.msra.mxu0 0.0
  %1042 = vmatprep.subr.mxu0 0.0
  %1043 = vmatpush1.msra.mxu0 0.0
  %1044 = vmatprep.subr.mxu0 0.0
  %1045 = vmatpush1.msra.mxu0 0.0
  %1046 = vmatprep.subr.mxu0 0.0
  %1047 = vmatpush1.msra.mxu0 0.0
  %1048 = vmatprep.subr.mxu0 0.0
  %1049 = vmatpush1.msra.mxu0 0.0
  %1050 = vmatprep.mubr.f32.mxu0 0.0
  %1051 = vmatmul.mubr.f32.gmra.mrb[0].mxu0 %v984
  %v1052 = vpop.f32.mrb[0].mxu0
  %v1053 = vadd.f32 %v980, %v1052
  %v1054 = vpop.f32.mrb[0].mxu0
  %1055 = vdwg.mxu0
  %v1056 = vrot.slane %v906, 1
  %v1057 = vsel %vm310, %v1056, 0
  %1059 = vmatprep.subr.mxu0 0.0
  %1060 = vmatpush1.msra.mxu0 %v259
  %1061 = vmatprep.subr.mxu0 0.0
  %1062 = vmatpush1.msra.mxu0 %v260
  %1063 = vmatprep.subr.mxu0 0.0
  %1064 = vmatpush1.msra.mxu0 %v261
  %1065 = vmatprep.subr.mxu0 0.0
  %1066 = vmatpush1.msra.mxu0 %v262
  %1067 = vmatprep.subr.mxu0 0.0
  %1068 = vmatpush1.msra.mxu0 %v263
  %1069 = vmatprep.subr.mxu0 0.0
  %1070 = vmatpush1.msra.mxu0 %v264
  %1071 = vmatprep.subr.mxu0 0.0
  %1072 = vmatpush1.msra.mxu0 0.0
  %1073 = vmatprep.subr.mxu0 0.0
  %1074 = vmatpush1.msra.mxu0 0.0
  %1075 = vmatprep.subr.mxu0 0.0
  %1076 = vmatpush1.msra.mxu0 0.0
  %1077 = vmatprep.subr.mxu0 0.0
  %1078 = vmatpush1.msra.mxu0 0.0
  %1079 = vmatprep.subr.mxu0 0.0
  %1080 = vmatpush1.msra.mxu0 0.0
  %1081 = vmatprep.subr.mxu0 0.0
  %1082 = vmatpush1.msra.mxu0 0.0
  %1083 = vmatprep.subr.mxu0 0.0
  %1084 = vmatpush1.msra.mxu0 0.0
  %1085 = vmatprep.subr.mxu0 0.0
  %1086 = vmatpush1.msra.mxu0 0.0
  %1087 = vmatprep.subr.mxu0 0.0
  %1088 = vmatpush1.msra.mxu0 0.0
  %1089 = vmatprep.subr.mxu0 0.0
  %1090 = vmatpush1.msra.mxu0 0.0
  %1091 = vmatprep.subr.mxu0 0.0
  %1092 = vmatpush1.msra.mxu0 0.0
  %1093 = vmatprep.subr.mxu0 0.0
  %1094 = vmatpush1.msra.mxu0 0.0
  %1095 = vmatprep.subr.mxu0 0.0
  %1096 = vmatpush1.msra.mxu0 0.0
  %1097 = vmatprep.subr.mxu0 0.0
  %1098 = vmatpush1.msra.mxu0 0.0
  %1099 = vmatprep.subr.mxu0 0.0
  %1100 = vmatpush1.msra.mxu0 0.0
  %1101 = vmatprep.subr.mxu0 0.0
  %1102 = vmatpush1.msra.mxu0 0.0
  %1103 = vmatprep.subr.mxu0 0.0
  %1104 = vmatpush1.msra.mxu0 0.0
  %1105 = vmatprep.subr.mxu0 0.0
  %1106 = vmatpush1.msra.mxu0 0.0
  %1107 = vmatprep.subr.mxu0 0.0
  %1108 = vmatpush1.msra.mxu0 0.0
  %1109 = vmatprep.subr.mxu0 0.0
  %1110 = vmatpush1.msra.mxu0 0.0
  %1111 = vmatprep.subr.mxu0 0.0
  %1112 = vmatpush1.msra.mxu0 0.0
  %1113 = vmatprep.subr.mxu0 0.0
  %1114 = vmatpush1.msra.mxu0 0.0
  %1115 = vmatprep.subr.mxu0 0.0
  %1116 = vmatpush1.msra.mxu0 0.0
  %1117 = vmatprep.subr.mxu0 0.0
  %1118 = vmatpush1.msra.mxu0 0.0
  %1119 = vmatprep.subr.mxu0 0.0
  %1120 = vmatpush1.msra.mxu0 0.0
  %1121 = vmatprep.subr.mxu0 0.0
  %1122 = vmatpush1.msra.mxu0 0.0
  %1123 = vmatprep.mubr.f32.mxu0 0.0
  %1124 = vmatmul.mubr.f32.gmra.mrb[0].mxu0 %v1057
  %v1125 = vpop.f32.mrb[0].mxu0
  %v1126 = vadd.f32 0.0, %v1125
  %v1127 = vpop.f32.mrb[0].mxu0
  %1128 = vdwg.mxu0
  %v1129 = vadd.f32 %v1053, %v1126
  %v1130 = vrot.slane %v909, 1
  %v1131 = vsel %vm310, %v1130, 0
  %1133 = vmatprep.subr.mxu0 0.0
  %1134 = vmatpush1.msra.mxu0 %v265
  %1135 = vmatprep.subr.mxu0 0.0
  %1136 = vmatpush1.msra.mxu0 %v266
  %1137 = vmatprep.subr.mxu0 0.0
  %1138 = vmatpush1.msra.mxu0 %v267
  %1139 = vmatprep.subr.mxu0 0.0
  %1140 = vmatpush1.msra.mxu0 %v268
  %1141 = vmatprep.subr.mxu0 0.0
  %1142 = vmatpush1.msra.mxu0 %v269
  %1143 = vmatprep.subr.mxu0 0.0
  %1144 = vmatpush1.msra.mxu0 %v270
  %1145 = vmatprep.subr.mxu0 0.0
  %1146 = vmatpush1.msra.mxu0 0.0
  %1147 = vmatprep.subr.mxu0 0.0
  %1148 = vmatpush1.msra.mxu0 0.0
  %1149 = vmatprep.subr.mxu0 0.0
  %1150 = vmatpush1.msra.mxu0 0.0
  %1151 = vmatprep.subr.mxu0 0.0
  %1152 = vmatpush1.msra.mxu0 0.0
  %1153 = vmatprep.subr.mxu0 0.0
  %1154 = vmatpush1.msra.mxu0 0.0
  %1155 = vmatprep.subr.mxu0 0.0
  %1156 = vmatpush1.msra.mxu0 0.0
  %1157 = vmatprep.subr.mxu0 0.0
  %1158 = vmatpush1.msra.mxu0 0.0
  %1159 = vmatprep.subr.mxu0 0.0
  %1160 = vmatpush1.msra.mxu0 0.0
  %1161 = vmatprep.subr.mxu0 0.0
  %1162 = vmatpush1.msra.mxu0 0.0
  %1163 = vmatprep.subr.mxu0 0.0
  %1164 = vmatpush1.msra.mxu0 0.0
  %1165 = vmatprep.subr.mxu0 0.0
  %1166 = vmatpush1.msra.mxu0 0.0
  %1167 = vmatprep.subr.mxu0 0.0
  %1168 = vmatpush1.msra.mxu0 0.0
  %1169 = vmatprep.subr.mxu0 0.0
  %1170 = vmatpush1.msra.mxu0 0.0
  %1171 = vmatprep.subr.mxu0 0.0
  %1172 = vmatpush1.msra.mxu0 0.0
  %1173 = vmatprep.subr.mxu0 0.0
  %1174 = vmatpush1.msra.mxu0 0.0
  %1175 = vmatprep.subr.mxu0 0.0
  %1176 = vmatpush1.msra.mxu0 0.0
  %1177 = vmatprep.subr.mxu0 0.0
  %1178 = vmatpush1.msra.mxu0 0.0
  %1179 = vmatprep.subr.mxu0 0.0
  %1180 = vmatpush1.msra.mxu0 0.0
  %1181 = vmatprep.subr.mxu0 0.0
  %1182 = vmatpush1.msra.mxu0 0.0
  %1183 = vmatprep.subr.mxu0 0.0
  %1184 = vmatpush1.msra.mxu0 0.0
  %1185 = vmatprep.subr.mxu0 0.0
  %1186 = vmatpush1.msra.mxu0 0.0
  %1187 = vmatprep.subr.mxu0 0.0
  %1188 = vmatpush1.msra.mxu0 0.0
  %1189 = vmatprep.subr.mxu0 0.0
  %1190 = vmatpush1.msra.mxu0 0.0
  %1191 = vmatprep.subr.mxu0 0.0
  %1192 = vmatpush1.msra.mxu0 0.0
  %1193 = vmatprep.subr.mxu0 0.0
  %1194 = vmatpush1.msra.mxu0 0.0
  %1195 = vmatprep.subr.mxu0 0.0
  %1196 = vmatpush1.msra.mxu0 0.0
  %1197 = vmatprep.mubr.f32.mxu0 0.0
  %1198 = vmatmul.mubr.f32.gmra.mrb[0].mxu0 %v1131
  %v1199 = vpop.f32.mrb[0].mxu0
  %v1200 = vadd.f32 0.0, %v1199
  %v1201 = vpop.f32.mrb[0].mxu0
  %1202 = vdwg.mxu0
  %v1203 = vadd.f32 %v1129, %v1200
  %v1204 = vrot.slane %v906, 2
  %v1205 = vsel %vm310, %v1204, 0
  %1207 = vmatprep.subr.mxu0 0.0
  %1208 = vmatpush1.msra.mxu0 %v271
  %1209 = vmatprep.subr.mxu0 0.0
  %1210 = vmatpush1.msra.mxu0 %v272
  %1211 = vmatprep.subr.mxu0 0.0
  %1212 = vmatpush1.msra.mxu0 %v273
  %1213 = vmatprep.subr.mxu0 0.0
  %1214 = vmatpush1.msra.mxu0 %v274
  %1215 = vmatprep.subr.mxu0 0.0
  %1216 = vmatpush1.msra.mxu0 %v275
  %1217 = vmatprep.subr.mxu0 0.0
  %1218 = vmatpush1.msra.mxu0 %v276
  %1219 = vmatprep.subr.mxu0 0.0
  %1220 = vmatpush1.msra.mxu0 0.0
  %1221 = vmatprep.subr.mxu0 0.0
  %1222 = vmatpush1.msra.mxu0 0.0
  %1223 = vmatprep.subr.mxu0 0.0
  %1224 = vmatpush1.msra.mxu0 0.0
  %1225 = vmatprep.subr.mxu0 0.0
  %1226 = vmatpush1.msra.mxu0 0.0
  %1227 = vmatprep.subr.mxu0 0.0
  %1228 = vmatpush1.msra.mxu0 0.0
  %1229 = vmatprep.subr.mxu0 0.0
  %1230 = vmatpush1.msra.mxu0 0.0
  %1231 = vmatprep.subr.mxu0 0.0
  %1232 = vmatpush1.msra.mxu0 0.0
  %1233 = vmatprep.subr.mxu0 0.0
  %1234 = vmatpush1.msra.mxu0 0.0
  %1235 = vmatprep.subr.mxu0 0.0
  %1236 = vmatpush1.msra.mxu0 0.0
  %1237 = vmatprep.subr.mxu0 0.0
  %1238 = vmatpush1.msra.mxu0 0.0
  %1239 = vmatprep.subr.mxu0 0.0
  %1240 = vmatpush1.msra.mxu0 0.0
  %1241 = vmatprep.subr.mxu0 0.0
  %1242 = vmatpush1.msra.mxu0 0.0
  %1243 = vmatprep.subr.mxu0 0.0
  %1244 = vmatpush1.msra.mxu0 0.0
  %1245 = vmatprep.subr.mxu0 0.0
  %1246 = vmatpush1.msra.mxu0 0.0
  %1247 = vmatprep.subr.mxu0 0.0
  %1248 = vmatpush1.msra.mxu0 0.0
  %1249 = vmatprep.subr.mxu0 0.0
  %1250 = vmatpush1.msra.mxu0 0.0
  %1251 = vmatprep.subr.mxu0 0.0
  %1252 = vmatpush1.msra.mxu0 0.0
  %1253 = vmatprep.subr.mxu0 0.0
  %1254 = vmatpush1.msra.mxu0 0.0
  %1255 = vmatprep.subr.mxu0 0.0
  %1256 = vmatpush1.msra.mxu0 0.0
  %1257 = vmatprep.subr.mxu0 0.0
  %1258 = vmatpush1.msra.mxu0 0.0
  %1259 = vmatprep.subr.mxu0 0.0
  %1260 = vmatpush1.msra.mxu0 0.0
  %1261 = vmatprep.subr.mxu0 0.0
  %1262 = vmatpush1.msra.mxu0 0.0
  %1263 = vmatprep.subr.mxu0 0.0
  %1264 = vmatpush1.msra.mxu0 0.0
  %1265 = vmatprep.subr.mxu0 0.0
  %1266 = vmatpush1.msra.mxu0 0.0
  %1267 = vmatprep.subr.mxu0 0.0
  %1268 = vmatpush1.msra.mxu0 0.0
  %1269 = vmatprep.subr.mxu0 0.0
  %1270 = vmatpush1.msra.mxu0 0.0
  %1271 = vmatprep.mubr.f32.mxu0 0.0
  %1272 = vmatmul.mubr.f32.gmra.mrb[0].mxu0 %v1205
  %v1273 = vpop.f32.mrb[0].mxu0
  %v1274 = vadd.f32 0.0, %v1273
  %v1275 = vpop.f32.mrb[0].mxu0
  %1276 = vdwg.mxu0
  %v1277 = vadd.f32 %v1203, %v1274
  %v1278 = vrot.slane %v909, 2
  %v1279 = vsel %vm310, %v1278, 0
  %1281 = vmatprep.subr.mxu0 0.0
  %1282 = vmatpush1.msra.mxu0 %v277
  %1283 = vmatprep.subr.mxu0 0.0
  %1284 = vmatpush1.msra.mxu0 %v278
  %1285 = vmatprep.subr.mxu0 0.0
  %1286 = vmatpush1.msra.mxu0 %v279
  %1287 = vmatprep.subr.mxu0 0.0
  %1288 = vmatpush1.msra.mxu0 %v280
  %1289 = vmatprep.subr.mxu0 0.0
  %1290 = vmatpush1.msra.mxu0 %v281
  %1291 = vmatprep.subr.mxu0 0.0
  %1292 = vmatpush1.msra.mxu0 %v282
  %1293 = vmatprep.subr.mxu0 0.0
  %1294 = vmatpush1.msra.mxu0 0.0
  %1295 = vmatprep.subr.mxu0 0.0
  %1296 = vmatpush1.msra.mxu0 0.0
  %1297 = vmatprep.subr.mxu0 0.0
  %1298 = vmatpush1.msra.mxu0 0.0
  %1299 = vmatprep.subr.mxu0 0.0
  %1300 = vmatpush1.msra.mxu0 0.0
  %1301 = vmatprep.subr.mxu0 0.0
  %1302 = vmatpush1.msra.mxu0 0.0
  %1303 = vmatprep.subr.mxu0 0.0
  %1304 = vmatpush1.msra.mxu0 0.0
  %1305 = vmatprep.subr.mxu0 0.0
  %1306 = vmatpush1.msra.mxu0 0.0
  %1307 = vmatprep.subr.mxu0 0.0
  %1308 = vmatpush1.msra.mxu0 0.0
  %1309 = vmatprep.subr.mxu0 0.0
  %1310 = vmatpush1.msra.mxu0 0.0
  %1311 = vmatprep.subr.mxu0 0.0
  %1312 = vmatpush1.msra.mxu0 0.0
  %1313 = vmatprep.subr.mxu0 0.0
  %1314 = vmatpush1.msra.mxu0 0.0
  %1315 = vmatprep.subr.mxu0 0.0
  %1316 = vmatpush1.msra.mxu0 0.0
  %1317 = vmatprep.subr.mxu0 0.0
  %1318 = vmatpush1.msra.mxu0 0.0
  %1319 = vmatprep.subr.mxu0 0.0
  %1320 = vmatpush1.msra.mxu0 0.0
  %1321 = vmatprep.subr.mxu0 0.0
  %1322 = vmatpush1.msra.mxu0 0.0
  %1323 = vmatprep.subr.mxu0 0.0
  %1324 = vmatpush1.msra.mxu0 0.0
  %1325 = vmatprep.subr.mxu0 0.0
  %1326 = vmatpush1.msra.mxu0 0.0
  %1327 = vmatprep.subr.mxu0 0.0
  %1328 = vmatpush1.msra.mxu0 0.0
  %1329 = vmatprep.subr.mxu0 0.0
  %1330 = vmatpush1.msra.mxu0 0.0
  %1331 = vmatprep.subr.mxu0 0.0
  %1332 = vmatpush1.msra.mxu0 0.0
  %1333 = vmatprep.subr.mxu0 0.0
  %1334 = vmatpush1.msra.mxu0 0.0
  %1335 = vmatprep.subr.mxu0 0.0
  %1336 = vmatpush1.msra.mxu0 0.0
  %1337 = vmatprep.subr.mxu0 0.0
  %1338 = vmatpush1.msra.mxu0 0.0
  %1339 = vmatprep.subr.mxu0 0.0
  %1340 = vmatpush1.msra.mxu0 0.0
  %1341 = vmatprep.subr.mxu0 0.0
  %1342 = vmatpush1.msra.mxu0 0.0
  %1343 = vmatprep.subr.mxu0 0.0
  %1344 = vmatpush1.msra.mxu0 0.0
  %1345 = vmatprep.mubr.f32.mxu0 0.0
  %1346 = vmatmul.mubr.f32.gmra.mrb[0].mxu0 %v1279
  %v1347 = vpop.f32.mrb[0].mxu0
  %v1348 = vadd.f32 0.0, %v1347
  %v1349 = vpop.f32.mrb[0].mxu0
  %1350 = vdwg.mxu0
  %v1351 = vadd.f32 %v1277, %v1348
  %v1352 = vrot.slane %v906, 3
  %v1353 = vsel %vm310, %v1352, 0
  %1355 = vmatprep.subr.mxu0 0.0
  %1356 = vmatpush1.msra.mxu0 %v283
  %1357 = vmatprep.subr.mxu0 0.0
  %1358 = vmatpush1.msra.mxu0 %v284
  %1359 = vmatprep.subr.mxu0 0.0
  %1360 = vmatpush1.msra.mxu0 %v285
  %1361 = vmatprep.subr.mxu0 0.0
  %1362 = vmatpush1.msra.mxu0 %v286
  %1363 = vmatprep.subr.mxu0 0.0
  %1364 = vmatpush1.msra.mxu0 %v287
  %1365 = vmatprep.subr.mxu0 0.0
  %1366 = vmatpush1.msra.mxu0 %v288
  %1367 = vmatprep.subr.mxu0 0.0
  %1368 = vmatpush1.msra.mxu0 0.0
  %1369 = vmatprep.subr.mxu0 0.0
  %1370 = vmatpush1.msra.mxu0 0.0
  %1371 = vmatprep.subr.mxu0 0.0
  %1372 = vmatpush1.msra.mxu0 0.0
  %1373 = vmatprep.subr.mxu0 0.0
  %1374 = vmatpush1.msra.mxu0 0.0
  %1375 = vmatprep.subr.mxu0 0.0
  %1376 = vmatpush1.msra.mxu0 0.0
  %1377 = vmatprep.subr.mxu0 0.0
  %1378 = vmatpush1.msra.mxu0 0.0
  %1379 = vmatprep.subr.mxu0 0.0
  %1380 = vmatpush1.msra.mxu0 0.0
  %1381 = vmatprep.subr.mxu0 0.0
  %1382 = vmatpush1.msra.mxu0 0.0
  %1383 = vmatprep.subr.mxu0 0.0
  %1384 = vmatpush1.msra.mxu0 0.0
  %1385 = vmatprep.subr.mxu0 0.0
  %1386 = vmatpush1.msra.mxu0 0.0
  %1387 = vmatprep.subr.mxu0 0.0
  %1388 = vmatpush1.msra.mxu0 0.0
  %1389 = vmatprep.subr.mxu0 0.0
  %1390 = vmatpush1.msra.mxu0 0.0
  %1391 = vmatprep.subr.mxu0 0.0
  %1392 = vmatpush1.msra.mxu0 0.0
  %1393 = vmatprep.subr.mxu0 0.0
  %1394 = vmatpush1.msra.mxu0 0.0
  %1395 = vmatprep.subr.mxu0 0.0
  %1396 = vmatpush1.msra.mxu0 0.0
  %1397 = vmatprep.subr.mxu0 0.0
  %1398 = vmatpush1.msra.mxu0 0.0
  %1399 = vmatprep.subr.mxu0 0.0
  %1400 = vmatpush1.msra.mxu0 0.0
  %1401 = vmatprep.subr.mxu0 0.0
  %1402 = vmatpush1.msra.mxu0 0.0
  %1403 = vmatprep.subr.mxu0 0.0
  %1404 = vmatpush1.msra.mxu0 0.0
  %1405 = vmatprep.subr.mxu0 0.0
  %1406 = vmatpush1.msra.mxu0 0.0
  %1407 = vmatprep.subr.mxu0 0.0
  %1408 = vmatpush1.msra.mxu0 0.0
  %1409 = vmatprep.subr.mxu0 0.0
  %1410 = vmatpush1.msra.mxu0 0.0
  %1411 = vmatprep.subr.mxu0 0.0
  %1412 = vmatpush1.msra.mxu0 0.0
  %1413 = vmatprep.subr.mxu0 0.0
  %1414 = vmatpush1.msra.mxu0 0.0
  %1415 = vmatprep.subr.mxu0 0.0
  %1416 = vmatpush1.msra.mxu0 0.0
  %1417 = vmatprep.subr.mxu0 0.0
  %1418 = vmatpush1.msra.mxu0 0.0
  %1419 = vmatprep.mubr.f32.mxu0 0.0
  %1420 = vmatmul.mubr.f32.gmra.mrb[0].mxu0 %v1353
  %v1421 = vpop.f32.mrb[0].mxu0
  %v1422 = vadd.f32 0.0, %v1421
  %v1423 = vpop.f32.mrb[0].mxu0
  %1424 = vdwg.mxu0
  %v1425 = vadd.f32 %v1351, %v1422
  %v1426 = vrot.slane %v909, 3
  %v1427 = vsel %vm310, %v1426, 0
  %1429 = vmatprep.subr.mxu0 0.0
  %1430 = vmatpush1.msra.mxu0 %v289
  %1431 = vmatprep.subr.mxu0 0.0
  %1432 = vmatpush1.msra.mxu0 %v290
  %1433 = vmatprep.subr.mxu0 0.0
  %1434 = vmatpush1.msra.mxu0 %v291
  %1435 = vmatprep.subr.mxu0 0.0
  %1436 = vmatpush1.msra.mxu0 %v292
  %1437 = vmatprep.subr.mxu0 0.0
  %1438 = vmatpush1.msra.mxu0 %v293
  %1439 = vmatprep.subr.mxu0 0.0
  %1440 = vmatpush1.msra.mxu0 %v294
  %1441 = vmatprep.subr.mxu0 0.0
  %1442 = vmatpush1.msra.mxu0 0.0
  %1443 = vmatprep.subr.mxu0 0.0
  %1444 = vmatpush1.msra.mxu0 0.0
  %1445 = vmatprep.subr.mxu0 0.0
  %1446 = vmatpush1.msra.mxu0 0.0
  %1447 = vmatprep.subr.mxu0 0.0
  %1448 = vmatpush1.msra.mxu0 0.0
  %1449 = vmatprep.subr.mxu0 0.0
  %1450 = vmatpush1.msra.mxu0 0.0
  %1451 = vmatprep.subr.mxu0 0.0
  %1452 = vmatpush1.msra.mxu0 0.0
  %1453 = vmatprep.subr.mxu0 0.0
  %1454 = vmatpush1.msra.mxu0 0.0
  %1455 = vmatprep.subr.mxu0 0.0
  %1456 = vmatpush1.msra.mxu0 0.0
  %1457 = vmatprep.subr.mxu0 0.0
  %1458 = vmatpush1.msra.mxu0 0.0
  %1459 = vmatprep.subr.mxu0 0.0
  %1460 = vmatpush1.msra.mxu0 0.0
  %1461 = vmatprep.subr.mxu0 0.0
  %1462 = vmatpush1.msra.mxu0 0.0
  %1463 = vmatprep.subr.mxu0 0.0
  %1464 = vmatpush1.msra.mxu0 0.0
  %1465 = vmatprep.subr.mxu0 0.0
  %1466 = vmatpush1.msra.mxu0 0.0
  %1467 = vmatprep.subr.mxu0 0.0
  %1468 = vmatpush1.msra.mxu0 0.0
  %1469 = vmatprep.subr.mxu0 0.0
  %1470 = vmatpush1.msra.mxu0 0.0
  %1471 = vmatprep.subr.mxu0 0.0
  %1472 = vmatpush1.msra.mxu0 0.0
  %1473 = vmatprep.subr.mxu0 0.0
  %1474 = vmatpush1.msra.mxu0 0.0
  %1475 = vmatprep.subr.mxu0 0.0
  %1476 = vmatpush1.msra.mxu0 0.0
  %1477 = vmatprep.subr.mxu0 0.0
  %1478 = vmatpush1.msra.mxu0 0.0
  %1479 = vmatprep.subr.mxu0 0.0
  %1480 = vmatpush1.msra.mxu0 0.0
  %1481 = vmatprep.subr.mxu0 0.0
  %1482 = vmatpush1.msra.mxu0 0.0
  %1483 = vmatprep.subr.mxu0 0.0
  %1484 = vmatpush1.msra.mxu0 0.0
  %1485 = vmatprep.subr.mxu0 0.0
  %1486 = vmatpush1.msra.mxu0 0.0
  %1487 = vmatprep.subr.mxu0 0.0
  %1488 = vmatpush1.msra.mxu0 0.0
  %1489 = vmatprep.subr.mxu0 0.0
  %1490 = vmatpush1.msra.mxu0 0.0
  %1491 = vmatprep.subr.mxu0 0.0
  %1492 = vmatpush1.msra.mxu0 0.0
  %1493 = vmatprep.mubr.f32.mxu0 0.0
  %1494 = vmatmul.mubr.f32.gmra.mrb[0].mxu0 %v1427
  %v1495 = vpop.f32.mrb[0].mxu0
  %v1496 = vadd.f32 0.0, %v1495
  %v1497 = vpop.f32.mrb[0].mxu0
  %1498 = vdwg.mxu0
  %v1499 = vadd.f32 %v1425, %v1496
  %vm1500 = vcmask 257024
  %v1501 = vsel %vm1500, %v900, 0.0
  %v1502 = vrot.slane %v1501, 4
  %v1503 = vadd.f32 %v1501, %v1502
  %v1504 = vrot.slane %v1503, 2
  %v1505 = vadd.f32 %v1503, %v1504
  %v1506 = vrot.slane %v1505, 1
  %v1507 = vadd.f32 %v1505, %v1506
  %v1508 = vsel %vm1500, %v1499, 0.0
  %v1509 = vrot.slane %v1508, 4
  %v1510 = vadd.f32 %v1508, %v1509
  %v1511 = vrot.slane %v1510, 2
  %v1512 = vadd.f32 %v1510, %v1511
  %v1513 = vrot.slane %v1512, 1
  %v1514 = vadd.f32 %v1512, %v1513
  %v1515 = vadd.f32 %v1507, %v1514
  %1517 = vrot.lane.b32.xlu0 %v1515, 120
  %v1518 = vpop.permute.xlu0 %1517
  %v1520 = vadd.f32 %v1515, %v1518
  %1521 = vrot.lane.b32.xlu0 %v1515, 112
  %v1522 = vpop.permute.xlu0 %1521
  %v1524 = vadd.f32 %v1520, %v1522
  %1525 = vrot.lane.b32.xlu0 %v1515, 104
  %v1526 = vpop.permute.xlu0 %1525
  %v1528 = vadd.f32 %v1524, %v1526
  %v1529 = vrcp.pop 32.0
  %v1530 = vmul.f32 %v1528, %v1529
  %1532 = vrot.lane.b32.xlu0 %v1530, 8
  %v1533 = vpop.permute.xlu0 %1532
  %1535 = vrot.lane.b32.xlu0 %v1530, 16
  %v1536 = vpop.permute.xlu0 %1535
  %1538 = vrot.lane.b32.xlu0 %v1530, 24
  %v1539 = vpop.permute.xlu0 %1538
  %vm1541 = vcmask 64512
  %v1542 = vsel %vm1541, %v1530, %v1533
  %vm1543 = vcmask 130048
  %v1544 = vsel %vm1543, %v1542, %v1536
  %vm1545 = vcmask 195584
  %v1546 = vsel %vm1545, %v1544, %v1539
  %v1547 = vlaneseq
  %v1548 = vshrl.u32 %v1547, 7
  %v1549 = vsub.s32 0, %v1548
  %v1550 = vrot.slane %v1546, %v1549
  %v1551 = vsub.f32 %v900, %v1550
  %v1552 = vsub.f32 %v1499, %v1550
  %v1553 = vmul.f32 %v1551, %v1551
  %v1554 = vsel %vm1500, %v1553, 0.0
  %v1555 = vrot.slane %v1554, 4
  %v1556 = vadd.f32 %v1554, %v1555
  %v1557 = vrot.slane %v1556, 2
  %v1558 = vadd.f32 %v1556, %v1557
  %v1559 = vrot.slane %v1558, 1
  %v1560 = vadd.f32 %v1558, %v1559
  %v1561 = vmul.f32 %v1552, %v1552
  %v1562 = vsel %vm1500, %v1561, 0.0
  %v1563 = vrot.slane %v1562, 4
  %v1564 = vadd.f32 %v1562, %v1563
  %v1565 = vrot.slane %v1564, 2
  %v1566 = vadd.f32 %v1564, %v1565
  %v1567 = vrot.slane %v1566, 1
  %v1568 = vadd.f32 %v1566, %v1567
  %v1569 = vadd.f32 %v1560, %v1568
  %1571 = vrot.lane.b32.xlu0 %v1569, 120
  %v1572 = vpop.permute.xlu0 %1571
  %v1574 = vadd.f32 %v1569, %v1572
  %1575 = vrot.lane.b32.xlu0 %v1569, 112
  %v1576 = vpop.permute.xlu0 %1575
  %v1578 = vadd.f32 %v1574, %v1576
  %1579 = vrot.lane.b32.xlu0 %v1569, 104
  %v1580 = vpop.permute.xlu0 %1579
  %v1582 = vadd.f32 %v1578, %v1580
  %v1583 = vmul.f32 %v1582, %v1529
  %v1584 = vadd.f32 %v1583, 1e-05
  %v1585 = vrsqrt.pop %v1584
  %v1586 = vmul.f32 %v295, %v1585
  %v1588 = vlaneseq
  %v1589 = vshrl.u32 %v1588, 7
  %v1590 = vsub.s32 0, %v1589
  %v1591 = vrot.slane %v1586, %v1590
  %1592 = vrot.lane.b32.xlu0 %v1591, 8
  %v1593 = vpop.permute.xlu0 %1592
  %1595 = vrot.lane.b32.xlu0 %v1591, 16
  %v1596 = vpop.permute.xlu0 %1595
  %1598 = vrot.lane.b32.xlu0 %v1591, 24
  %v1599 = vpop.permute.xlu0 %1598
  %v1601 = vsel %vm1541, %v1586, %v1593
  %v1602 = vsel %vm1543, %v1601, %v1596
  %v1603 = vsel %vm1545, %v1602, %v1599
  %v1605 = vlaneseq
  %v1606 = vshrl.u32 %v1605, 7
  %v1607 = vsub.s32 0, %v1606
  %v1608 = vrot.slane %v295, %v1607
  %1609 = vrot.lane.b32.xlu0 %v1608, 120
  %v1610 = vpop.permute.xlu0 %1609
  %1612 = vrot.lane.b32.xlu0 %v1608, 8
  %v1613 = vpop.permute.xlu0 %1612
  %1615 = vrot.lane.b32.xlu0 %v1608, 16
  %v1616 = vpop.permute.xlu0 %1615
  %v1618 = vsel %vm1541, %v1610, %v295
  %v1619 = vsel %vm1543, %v1618, %v1613
  %v1620 = vsel %vm1545, %v1619, %v1616
  %v1621 = vlaneseq
  %v1622 = vshrl.u32 %v1621, 7
  %v1623 = vsub.s32 0, %v1622
  %v1624 = vrot.slane %v1603, %v1623
  %v1625 = vmul.f32 %v1551, %v1624
  %v1626 = vlaneseq
  %v1627 = vshrl.u32 %v1626, 7
  %v1628 = vsub.s32 0, %v1627
  %v1629 = vrot.slane %v1620, %v1628
  %v1630 = vadd.f32 %v1625, %v1629
  %vm1631 = vcmp.ge.f32.partialorder %v1630, 0.0
  %v1632 = vmul.f32 %v1630, 0.2
  %v1633 = vsel %vm1631, %v1630, %v1632
  %v1635 = vrot.slane %v1633, 1
  %1636 = vrot.lane.b32.xlu0 %v1635, 32
  %v1637 = vpop.permute.xlu0 %1636
  %v1639 = vrot.slane %v1633, 2
  %1640 = vrot.lane.b32.xlu0 %v1639, 64
  %v1641 = vpop.permute.xlu0 %1640
  %v1643 = vrot.slane %v1633, 3
  %1644 = vrot.lane.b32.xlu0 %v1643, 96
  %v1645 = vpop.permute.xlu0 %1644
  %vm1647 = vcmask 261120
  %v1648 = vsel %vm1647, %v1633, %v1637
  %vm1649 = vcmask 523264
  %v1650 = vsel %vm1649, %v1648, %v1641
  %vm1651 = vcmask 785408
  %v1652 = vsel %vm1651, %v1650, %v1645
  %v1653 = vmul.f32 %v1552, %v1624
  %v1654 = vadd.f32 %v1653, %v1629
  %vm1655 = vcmp.ge.f32.partialorder %v1654, 0.0
  %v1656 = vmul.f32 %v1654, 0.2
  %v1657 = vsel %vm1655, %v1654, %v1656
  %v1659 = vrot.slane %v1657, 1
  %1660 = vrot.lane.b32.xlu0 %v1659, 32
  %v1661 = vpop.permute.xlu0 %1660
  %v1663 = vrot.slane %v1657, 2
  %1664 = vrot.lane.b32.xlu0 %v1663, 64
  %v1665 = vpop.permute.xlu0 %1664
  %v1667 = vrot.slane %v1657, 3
  %1668 = vrot.lane.b32.xlu0 %v1667, 96
  %v1669 = vpop.permute.xlu0 %1668
  %v1671 = vsel %vm1647, %v1657, %v1661
  %v1672 = vsel %vm1649, %v1671, %v1665
  %v1673 = vsel %vm1651, %v1672, %v1669
  %v1675 = vrot.slane %v1673, 7
  %v1677 = vsel %vm299, %v1652, %v1675
  %v1678 = vld [vmem:[%s3] sm:$0xff]
  %v1679 = vld [vmem:[%s3 + $0x8] sm:$0xff]
  %v1680 = vld [vmem:[%s3 + $0x10] sm:$0xff]
  %v1681 = vld [vmem:[%s3 + $0x18] sm:$0xff]
  %v1682 = vld [vmem:[%s3 + $0x20] sm:$0xff]
  %v1683 = vld [vmem:[%s3 + $0x28] sm:$0xff]
  %v1684 = vld [vmem:[%s3 + $0x30] sm:$0xff]
  %v1685 = vld [vmem:[%s3 + $0x38] sm:$0xff]
  %v1686 = vld [vmem:[%s3 + $0x40] sm:$0xff]
  %v1687 = vld [vmem:[%s3 + $0x48] sm:$0xff]
  %v1688 = vld [vmem:[%s3 + $0x50] sm:$0xff]
  %v1689 = vld [vmem:[%s3 + $0x58] sm:$0xff]
  %v1690 = vld [vmem:[%s3 + $0x60] sm:$0xff]
  %v1691 = vld [vmem:[%s3 + $0x68] sm:$0xff]
  %v1692 = vld [vmem:[%s3 + $0x70] sm:$0xff]
  %v1693 = vld [vmem:[%s3 + $0x78] sm:$0xff]
  %1694 = vrot.lane.b32.xlu0 %v1608, 112
  %v1695 = vpop.permute.xlu0 %1694
  %1697 = vmatprep.subr.mxu0 0.0
  %1698 = vmatpush1.msra.mxu0 %v1678
  %1699 = vmatprep.subr.mxu0 0.0
  %1700 = vmatpush1.msra.mxu0 %v1679
  %1701 = vmatprep.subr.mxu0 0.0
  %1702 = vmatpush1.msra.mxu0 %v1680
  %1703 = vmatprep.subr.mxu0 0.0
  %1704 = vmatpush1.msra.mxu0 %v1681
  %1705 = vmatprep.subr.mxu0 0.0
  %1706 = vmatpush1.msra.mxu0 %v1682
  %1707 = vmatprep.subr.mxu0 0.0
  %1708 = vmatpush1.msra.mxu0 %v1683
  %1709 = vmatprep.subr.mxu0 0.0
  %1710 = vmatpush1.msra.mxu0 %v1684
  %1711 = vmatprep.subr.mxu0 0.0
  %1712 = vmatpush1.msra.mxu0 %v1685
  %1713 = vmatprep.subr.mxu0 0.0
  %1714 = vmatpush1.msra.mxu0 %v1686
  %1715 = vmatprep.subr.mxu0 0.0
  %1716 = vmatpush1.msra.mxu0 %v1687
  %1717 = vmatprep.subr.mxu0 0.0
  %1718 = vmatpush1.msra.mxu0 %v1688
  %1719 = vmatprep.subr.mxu0 0.0
  %1720 = vmatpush1.msra.mxu0 %v1689
  %1721 = vmatprep.subr.mxu0 0.0
  %1722 = vmatpush1.msra.mxu0 %v1690
  %1723 = vmatprep.subr.mxu0 0.0
  %1724 = vmatpush1.msra.mxu0 %v1691
  %1725 = vmatprep.subr.mxu0 0.0
  %1726 = vmatpush1.msra.mxu0 %v1692
  %1727 = vmatprep.subr.mxu0 0.0
  %1728 = vmatpush1.msra.mxu0 %v1693
  %1729 = vmatprep.subr.mxu0 0.0
  %1730 = vmatpush1.msra.mxu0 0.0
  %1731 = vmatprep.subr.mxu0 0.0
  %1732 = vmatpush1.msra.mxu0 0.0
  %1733 = vmatprep.subr.mxu0 0.0
  %1734 = vmatpush1.msra.mxu0 0.0
  %1735 = vmatprep.subr.mxu0 0.0
  %1736 = vmatpush1.msra.mxu0 0.0
  %1737 = vmatprep.subr.mxu0 0.0
  %1738 = vmatpush1.msra.mxu0 0.0
  %1739 = vmatprep.subr.mxu0 0.0
  %1740 = vmatpush1.msra.mxu0 0.0
  %1741 = vmatprep.subr.mxu0 0.0
  %1742 = vmatpush1.msra.mxu0 0.0
  %1743 = vmatprep.subr.mxu0 0.0
  %1744 = vmatpush1.msra.mxu0 0.0
  %1745 = vmatprep.subr.mxu0 0.0
  %1746 = vmatpush1.msra.mxu0 0.0
  %1747 = vmatprep.subr.mxu0 0.0
  %1748 = vmatpush1.msra.mxu0 0.0
  %1749 = vmatprep.subr.mxu0 0.0
  %1750 = vmatpush1.msra.mxu0 0.0
  %1751 = vmatprep.subr.mxu0 0.0
  %1752 = vmatpush1.msra.mxu0 0.0
  %1753 = vmatprep.subr.mxu0 0.0
  %1754 = vmatpush1.msra.mxu0 0.0
  %1755 = vmatprep.subr.mxu0 0.0
  %1756 = vmatpush1.msra.mxu0 0.0
  %1757 = vmatprep.subr.mxu0 0.0
  %1758 = vmatpush1.msra.mxu0 0.0
  %1759 = vmatprep.subr.mxu0 0.0
  %1760 = vmatpush1.msra.mxu0 0.0
  %1761 = vmatprep.mubr.f32.mxu0 0.0
  %1762 = vmatmul.mubr.f32.gmra.mrb[0].mxu0 %v1677
  %v1763 = vpop.f32.mrb[0].mxu0
  %v1764 = vadd.f32 %v1695, %v1763
  %v1765 = vpop.f32.mrb[0].mxu0
  %1766 = vdwg.mxu0
  %vm1767 = vcmask 123904
  %1768 = vst.msk [vmem:[%s5] sm:$0x3] %vm1767, %v1764
  // Predicated region
  $region22: #{_lambda_.1} parent=0 // pred_check
    _
  $region23: #{_lambda_.1} parent=0 // pred_check_branch
    %1770 = sbr.rel (0) target = $region25
  $region24: #{_lambda_.1} parent=0 // pred_region
    _
  $region25: #{_lambda_.1} parent=0 // pred_fallthru
    _
  // Predicated region
  $region26: #{_lambda_.1} parent=0 // pred_check
    _
  $region27: #{_lambda_.1} parent=0 // pred_check_branch
    %1772 = sbr.rel (0) target = $region29
  $region28: #{_lambda_.1} parent=0 // pred_region
    _
  $region29: #{_lambda_.1} parent=0 // pred_fallthru
    _

</llo_original>
